<compile_context>
chip_gen: v6e
topology: v6e:2x2x1
jax: 0.10.0
libtpu: 0.0.40
codegen_flags: <defaults>
</compile_context>

<pallas_src>
import jax
import jax.numpy as jnp
from jax.experimental import pallas as pl
from jax.experimental.pallas import tpu as pltpu

NUM_HIDDEN_LAYERS = 8  # 8 x (Linear + Sigmoid), followed by one final Linear
SUBLANE = 8


def _pack_factor():
    """Rows packed into the lane axis; chosen to match the MXU tile width.

    v6e / v7x: 256-wide MXU -> P=8 (K=N=256, final output = 8*16 = 128 lanes).
    v5e (and older): 128-wide MXU -> P=4 (K=N=128).
    """
    try:
        kind = jax.devices()[0].device_kind.lower()
    except Exception:
        return 8
    return 8 if ("v6" in kind or "v7" in kind) else 4


def _make_mlp_kernel(n_layers, n_streams, rows_per_stream):
    """Whole MLP stack fused in one kernel, one packed batch tile per grid step.

    refs = (w0, b0, ..., w8, b8, o_ref); wi is block-diagonal (P*in, P*out),
    bi is (1, P*out). Hidden layers use sigmoid, the last layer is affine only.
    """

    def kernel(x_ref, *refs):
        o_ref = refs[-1]
        prm = refs[:-1]
        # Independent row streams => independent dependency chains, so the LLO
        # scheduler can overlap one stream's MXU pushes with the other stream's
        # bias-add + sigmoid (VPU/EUP) work.
        hs = [
            x_ref[pl.ds(s * rows_per_stream, rows_per_stream), :].astype(jnp.float32)
            for s in range(n_streams)
        ]
        for layer in range(n_layers):
            w = prm[2 * layer][...]
            b = prm[2 * layer + 1][...]          # (1, P*out) -> VPU broadcast add
            hs = [jnp.dot(h, w, preferred_element_type=jnp.float32) + b for h in hs]
            if layer < n_layers - 1:
                # sigmoid(x) == 0.5*tanh(0.5*x) + 0.5  -> single EUP op + cheap VPU ops
                hs = [0.5 * jnp.tanh(0.5 * h) + 0.5 for h in hs]
        for s in range(n_streams):
            o_ref[pl.ds(s * rows_per_stream, rows_per_stream), :] = hs[s].astype(o_ref.dtype)

    return kernel


def neural_network_model(x, params, tile_batch=2048, pack=None):
    """params: list of (W, b) with W shaped (in, out), b shaped (1, out)."""
    batch, in_features = x.shape
    out_features = params[-1][0].shape[1]
    P = _pack_factor() if pack is None else pack

    # --- batch tiling: tiles are multiples of 8*P rows so the packed tile has a
    #     sublane-aligned row count (tb/P is a multiple of 8). ------------------
    group = SUBLANE * P
    b_grp = pl.cdiv(batch, group) * group          # batch rounded up to a row group
    tb = min(tile_batch, b_grp)
    tb = max(group, (tb // group) * group)         # multiple of group
    # Give the second TensorCore work (v7x) when there is enough batch for >=2 steps.
    if b_grp // tb < 2 and b_grp >= 2 * group:
        tb = max(group, ((b_grp // 2) // group) * group)
    padded_batch = pl.cdiv(b_grp, tb) * tb
    if padded_batch != batch:
        x = jnp.pad(x, ((0, padded_batch - batch), (0, 0)))

    # --- lane packing: P rows per packed row (free reshape on row-major data) --
    xp = x.reshape(padded_batch // P, P * in_features)
    tb_p = tb // P

    # --- block-diagonal weights / tiled biases: every layer becomes lane-dense -
    flat = []
    eye = jnp.eye(P, dtype=jnp.float32)
    for w, b in params:
        flat.append(jnp.kron(eye, w))              # (P*in, P*out), block diagonal
        flat.append(jnp.tile(b, (1, P)))           # (1, P*out)

    n_streams = 2 if (tb_p % 16 == 0) else 1
    rows_per_stream = tb_p // n_streams
    kernel = _make_mlp_kernel(len(params), n_streams, rows_per_stream)

    # Weights / biases: whole-array blocks, resident in VMEM across all grid steps.
    param_specs = [pl.BlockSpec(arr.shape, lambda i: (0, 0)) for arr in flat]

    out_p = pl.pallas_call(
        kernel,
        out_shape=jax.ShapeDtypeStruct((padded_batch // P, P * out_features), jnp.float32),
        grid=(padded_batch // tb,),
        in_specs=[pl.BlockSpec((tb_p, P * in_features), lambda i: (i, 0))] + param_specs,
        out_specs=pl.BlockSpec((tb_p, P * out_features), lambda i: (i, 0)),
        compiler_params=pltpu.CompilerParams(
            dimension_semantics=("parallel",),     # megacore / dual-TC sharding
        ),
    )(xp, *flat)

    out = out_p.reshape(padded_batch, out_features)   # un-pack (free reshape)
    return out[:batch]


def init_params(key, input_features, hidden_units, output_features):
    """Deterministic init mimicking nn.Linear's U(-1/sqrt(fan_in), 1/sqrt(fan_in)).

    Weights are stored transposed: (in_features, out_features).
    """
    dims = [input_features] + [hidden_units] * NUM_HIDDEN_LAYERS + [output_features]
    params = []
    for i in range(len(dims) - 1):
        fan_in, fan_out = dims[i], dims[i + 1]
        key, kw, kb = jax.random.split(key, 3)
        bound = 1.0 / jnp.sqrt(float(fan_in))
        w = jax.random.uniform(kw, (fan_in, fan_out), jnp.float32, -bound, bound)
        b = jax.random.uniform(kb, (1, fan_out), jnp.float32, -bound, bound)
        params.append((w, b))
    return params


def reference(x, params):
    h = x
    for i, (w, b) in enumerate(params):
        h = h @ w + b
        if i < len(params) - 1:
            h = jax.nn.sigmoid(h)
    return h


if __name__ == "__main__":
    input_features, hidden_units, output_features = 32, 32, 16

    key = jax.random.PRNGKey(0)
    params = init_params(key, input_features, hidden_units, output_features)

    # Test 1: small batch -> single grid step, single stream.
    key, kx = jax.random.split(key)
    x = jax.random.normal(kx, (8, input_features), jnp.float32)
    out = jax.block_until_ready(neural_network_model(x, params))
    ref = reference(x, params)
    assert out.shape == (8, output_features), out.shape
    assert jnp.allclose(out, ref, atol=2e-5, rtol=2e-5), "mismatch vs reference (batch=8)"

    # Test 2: non-aligned batch -> row padding path.
    key, kx = jax.random.split(key)
    x2 = jax.random.normal(kx, (24, input_features), jnp.float32)
    out2 = jax.block_until_ready(neural_network_model(x2, params, tile_batch=16))
    ref2 = reference(x2, params)
    assert out2.shape == (24, output_features), out2.shape
    assert jnp.allclose(out2, ref2, atol=2e-5, rtol=2e-5), "mismatch vs reference (batch=24)"

    # Test 3: larger batch, default tiling -> multi-step grid (>=2 steps for dual-TC).
    key, kx = jax.random.split(key)
    x3 = jax.random.normal(kx, (300, input_features), jnp.float32)
    out3 = jax.block_until_ready(neural_network_model(x3, params))
    ref3 = reference(x3, params)
    assert out3.shape == (300, output_features), out3.shape
    assert jnp.allclose(out3, ref3, atol=2e-5, rtol=2e-5), "mismatch vs reference (batch=300)"

    # Test 4: explicit tile -> exercises the two-stream kernel body on all chips.
    out4 = jax.block_until_ready(neural_network_model(x3, params, tile_batch=128))
    assert out4.shape == (300, output_features), out4.shape
    assert jnp.allclose(out4, ref3, atol=2e-5, rtol=2e-5), "mismatch vs reference (tiled)"

    print("KERNEL_OK")
</pallas_src>

<mosaic_0001>
module attributes {stable_mosaic.version = 11 : i64} {
  func.func @kernel(%arg0: i32, %arg1: memref<8x128xf32, #tpu.memory_space<vmem>>, %arg2: memref<128x128xf32, #tpu.memory_space<vmem>>, %arg3: memref<1x128xf32, #tpu.memory_space<vmem>>, %arg4: memref<128x128xf32, #tpu.memory_space<vmem>>, %arg5: memref<1x128xf32, #tpu.memory_space<vmem>>, %arg6: memref<128x128xf32, #tpu.memory_space<vmem>>, %arg7: memref<1x128xf32, #tpu.memory_space<vmem>>, %arg8: memref<128x128xf32, #tpu.memory_space<vmem>>, %arg9: memref<1x128xf32, #tpu.memory_space<vmem>>, %arg10: memref<128x128xf32, #tpu.memory_space<vmem>>, %arg11: memref<1x128xf32, #tpu.memory_space<vmem>>, %arg12: memref<128x128xf32, #tpu.memory_space<vmem>>, %arg13: memref<1x128xf32, #tpu.memory_space<vmem>>, %arg14: memref<128x128xf32, #tpu.memory_space<vmem>>, %arg15: memref<1x128xf32, #tpu.memory_space<vmem>>, %arg16: memref<128x128xf32, #tpu.memory_space<vmem>>, %arg17: memref<1x128xf32, #tpu.memory_space<vmem>>, %arg18: memref<128x64xf32, #tpu.memory_space<vmem>>, %arg19: memref<1x64xf32, #tpu.memory_space<vmem>>, %arg20: memref<8x64xf32, #tpu.memory_space<vmem>>) attributes {dimension_semantics = [#tpu.dimension_semantics<parallel>], iteration_bounds = array<i64: 1>, scalar_prefetch = 0 : i64, scratch_operands = 0 : i64, tpu.core_type = #tpu.core_type<tc>, window_params = [{transform_indices = @transform_0, window_bounds = array<i64: 8, 128>}, {pipeline_mode = #tpu.pipeline_mode<synchronous>, transform_indices = @transform_1, window_bounds = array<i64: 128, 128>}, {pipeline_mode = #tpu.pipeline_mode<synchronous>, transform_indices = @transform_2, window_bounds = array<i64: 1, 128>}, {pipeline_mode = #tpu.pipeline_mode<synchronous>, transform_indices = @transform_3, window_bounds = array<i64: 128, 128>}, {pipeline_mode = #tpu.pipeline_mode<synchronous>, transform_indices = @transform_4, window_bounds = array<i64: 1, 128>}, {pipeline_mode = #tpu.pipeline_mode<synchronous>, transform_indices = @transform_5, window_bounds = array<i64: 128, 128>}, {pipeline_mode = #tpu.pipeline_mode<synchronous>, transform_indices = @transform_6, window_bounds = array<i64: 1, 128>}, {pipeline_mode = #tpu.pipeline_mode<synchronous>, transform_indices = @transform_7, window_bounds = array<i64: 128, 128>}, {pipeline_mode = #tpu.pipeline_mode<synchronous>, transform_indices = @transform_8, window_bounds = array<i64: 1, 128>}, {pipeline_mode = #tpu.pipeline_mode<synchronous>, transform_indices = @transform_9, window_bounds = array<i64: 128, 128>}, {pipeline_mode = #tpu.pipeline_mode<synchronous>, transform_indices = @transform_10, window_bounds = array<i64: 1, 128>}, {pipeline_mode = #tpu.pipeline_mode<synchronous>, transform_indices = @transform_11, window_bounds = array<i64: 128, 128>}, {pipeline_mode = #tpu.pipeline_mode<synchronous>, transform_indices = @transform_12, window_bounds = array<i64: 1, 128>}, {pipeline_mode = #tpu.pipeline_mode<synchronous>, transform_indices = @transform_13, window_bounds = array<i64: 128, 128>}, {pipeline_mode = #tpu.pipeline_mode<synchronous>, transform_indices = @transform_14, window_bounds = array<i64: 1, 128>}, {pipeline_mode = #tpu.pipeline_mode<synchronous>, transform_indices = @transform_15, window_bounds = array<i64: 128, 128>}, {pipeline_mode = #tpu.pipeline_mode<synchronous>, transform_indices = @transform_16, window_bounds = array<i64: 1, 128>}, {pipeline_mode = #tpu.pipeline_mode<synchronous>, transform_indices = @transform_17, window_bounds = array<i64: 128, 64>}, {pipeline_mode = #tpu.pipeline_mode<synchronous>, transform_indices = @transform_18, window_bounds = array<i64: 1, 64>}, {transform_indices = @transform_19, window_bounds = array<i64: 8, 64>}]} {
    %c0 = arith.constant 0 : index
    %c0_0 = arith.constant 0 : index
    %0 = vector.load %arg1[%c0, %c0_0] : memref<8x128xf32, #tpu.memory_space<vmem>>, vector<8x128xf32>
    %c0_1 = arith.constant 0 : index
    %c0_2 = arith.constant 0 : index
    %1 = vector.load %arg2[%c0_1, %c0_2] : memref<128x128xf32, #tpu.memory_space<vmem>>, vector<128x128xf32>
    %c0_3 = arith.constant 0 : index
    %c0_4 = arith.constant 0 : index
    %2 = vector.load %arg3[%c0_3, %c0_4] : memref<1x128xf32, #tpu.memory_space<vmem>>, vector<1x128xf32>
    %cst = arith.constant dense<0.000000e+00> : vector<8x128xf32>
    %3 = tpu.matmul %0, %1, %cst {dimension_numbers = #tpu.dot_dimension_numbers<[1], [0], [0], [1], [0, 0, 1, 1], [], []>} : vector<8x128xf32>, vector<128x128xf32>, vector<8x128xf32> -> vector<8x128xf32>
    %4 = vector.broadcast %2 : vector<1x128xf32> to vector<8x128xf32>
    %5 = arith.addf %3, %4 : vector<8x128xf32>
    %cst_5 = arith.constant 5.000000e-01 : f32
    %6 = vector.broadcast %cst_5 : f32 to vector<8x128xf32>
    %7 = arith.mulf %6, %5 : vector<8x128xf32>
    %8 = math.tanh %7 : vector<8x128xf32>
    %cst_6 = arith.constant 5.000000e-01 : f32
    %9 = vector.broadcast %cst_6 : f32 to vector<8x128xf32>
    %10 = arith.mulf %9, %8 : vector<8x128xf32>
    %cst_7 = arith.constant 5.000000e-01 : f32
    %11 = vector.broadcast %cst_7 : f32 to vector<8x128xf32>
    %12 = arith.addf %10, %11 : vector<8x128xf32>
    %c0_8 = arith.constant 0 : index
    %c0_9 = arith.constant 0 : index
    %13 = vector.load %arg4[%c0_8, %c0_9] : memref<128x128xf32, #tpu.memory_space<vmem>>, vector<128x128xf32>
    %c0_10 = arith.constant 0 : index
    %c0_11 = arith.constant 0 : index
    %14 = vector.load %arg5[%c0_10, %c0_11] : memref<1x128xf32, #tpu.memory_space<vmem>>, vector<1x128xf32>
    %cst_12 = arith.constant dense<0.000000e+00> : vector<8x128xf32>
    %15 = tpu.matmul %12, %13, %cst_12 {dimension_numbers = #tpu.dot_dimension_numbers<[1], [0], [0], [1], [0, 0, 1, 1], [], []>} : vector<8x128xf32>, vector<128x128xf32>, vector<8x128xf32> -> vector<8x128xf32>
    %16 = vector.broadcast %14 : vector<1x128xf32> to vector<8x128xf32>
    %17 = arith.addf %15, %16 : vector<8x128xf32>
    %cst_13 = arith.constant 5.000000e-01 : f32
    %18 = vector.broadcast %cst_13 : f32 to vector<8x128xf32>
    %19 = arith.mulf %18, %17 : vector<8x128xf32>
    %20 = math.tanh %19 : vector<8x128xf32>
    %cst_14 = arith.constant 5.000000e-01 : f32
    %21 = vector.broadcast %cst_14 : f32 to vector<8x128xf32>
    %22 = arith.mulf %21, %20 : vector<8x128xf32>
    %cst_15 = arith.constant 5.000000e-01 : f32
    %23 = vector.broadcast %cst_15 : f32 to vector<8x128xf32>
    %24 = arith.addf %22, %23 : vector<8x128xf32>
    %c0_16 = arith.constant 0 : index
    %c0_17 = arith.constant 0 : index
    %25 = vector.load %arg6[%c0_16, %c0_17] : memref<128x128xf32, #tpu.memory_space<vmem>>, vector<128x128xf32>
    %c0_18 = arith.constant 0 : index
    %c0_19 = arith.constant 0 : index
    %26 = vector.load %arg7[%c0_18, %c0_19] : memref<1x128xf32, #tpu.memory_space<vmem>>, vector<1x128xf32>
    %cst_20 = arith.constant dense<0.000000e+00> : vector<8x128xf32>
    %27 = tpu.matmul %24, %25, %cst_20 {dimension_numbers = #tpu.dot_dimension_numbers<[1], [0], [0], [1], [0, 0, 1, 1], [], []>} : vector<8x128xf32>, vector<128x128xf32>, vector<8x128xf32> -> vector<8x128xf32>
    %28 = vector.broadcast %26 : vector<1x128xf32> to vector<8x128xf32>
    %29 = arith.addf %27, %28 : vector<8x128xf32>
    %cst_21 = arith.constant 5.000000e-01 : f32
    %30 = vector.broadcast %cst_21 : f32 to vector<8x128xf32>
    %31 = arith.mulf %30, %29 : vector<8x128xf32>
    %32 = math.tanh %31 : vector<8x128xf32>
    %cst_22 = arith.constant 5.000000e-01 : f32
    %33 = vector.broadcast %cst_22 : f32 to vector<8x128xf32>
    %34 = arith.mulf %33, %32 : vector<8x128xf32>
    %cst_23 = arith.constant 5.000000e-01 : f32
    %35 = vector.broadcast %cst_23 : f32 to vector<8x128xf32>
    %36 = arith.addf %34, %35 : vector<8x128xf32>
    %c0_24 = arith.constant 0 : index
    %c0_25 = arith.constant 0 : index
    %37 = vector.load %arg8[%c0_24, %c0_25] : memref<128x128xf32, #tpu.memory_space<vmem>>, vector<128x128xf32>
    %c0_26 = arith.constant 0 : index
    %c0_27 = arith.constant 0 : index
    %38 = vector.load %arg9[%c0_26, %c0_27] : memref<1x128xf32, #tpu.memory_space<vmem>>, vector<1x128xf32>
    %cst_28 = arith.constant dense<0.000000e+00> : vector<8x128xf32>
    %39 = tpu.matmul %36, %37, %cst_28 {dimension_numbers = #tpu.dot_dimension_numbers<[1], [0], [0], [1], [0, 0, 1, 1], [], []>} : vector<8x128xf32>, vector<128x128xf32>, vector<8x128xf32> -> vector<8x128xf32>
    %40 = vector.broadcast %38 : vector<1x128xf32> to vector<8x128xf32>
    %41 = arith.addf %39, %40 : vector<8x128xf32>
    %cst_29 = arith.constant 5.000000e-01 : f32
    %42 = vector.broadcast %cst_29 : f32 to vector<8x128xf32>
    %43 = arith.mulf %42, %41 : vector<8x128xf32>
    %44 = math.tanh %43 : vector<8x128xf32>
    %cst_30 = arith.constant 5.000000e-01 : f32
    %45 = vector.broadcast %cst_30 : f32 to vector<8x128xf32>
    %46 = arith.mulf %45, %44 : vector<8x128xf32>
    %cst_31 = arith.constant 5.000000e-01 : f32
    %47 = vector.broadcast %cst_31 : f32 to vector<8x128xf32>
    %48 = arith.addf %46, %47 : vector<8x128xf32>
    %c0_32 = arith.constant 0 : index
    %c0_33 = arith.constant 0 : index
    %49 = vector.load %arg10[%c0_32, %c0_33] : memref<128x128xf32, #tpu.memory_space<vmem>>, vector<128x128xf32>
    %c0_34 = arith.constant 0 : index
    %c0_35 = arith.constant 0 : index
    %50 = vector.load %arg11[%c0_34, %c0_35] : memref<1x128xf32, #tpu.memory_space<vmem>>, vector<1x128xf32>
    %cst_36 = arith.constant dense<0.000000e+00> : vector<8x128xf32>
    %51 = tpu.matmul %48, %49, %cst_36 {dimension_numbers = #tpu.dot_dimension_numbers<[1], [0], [0], [1], [0, 0, 1, 1], [], []>} : vector<8x128xf32>, vector<128x128xf32>, vector<8x128xf32> -> vector<8x128xf32>
    %52 = vector.broadcast %50 : vector<1x128xf32> to vector<8x128xf32>
    %53 = arith.addf %51, %52 : vector<8x128xf32>
    %cst_37 = arith.constant 5.000000e-01 : f32
    %54 = vector.broadcast %cst_37 : f32 to vector<8x128xf32>
    %55 = arith.mulf %54, %53 : vector<8x128xf32>
    %56 = math.tanh %55 : vector<8x128xf32>
    %cst_38 = arith.constant 5.000000e-01 : f32
    %57 = vector.broadcast %cst_38 : f32 to vector<8x128xf32>
    %58 = arith.mulf %57, %56 : vector<8x128xf32>
    %cst_39 = arith.constant 5.000000e-01 : f32
    %59 = vector.broadcast %cst_39 : f32 to vector<8x128xf32>
    %60 = arith.addf %58, %59 : vector<8x128xf32>
    %c0_40 = arith.constant 0 : index
    %c0_41 = arith.constant 0 : index
    %61 = vector.load %arg12[%c0_40, %c0_41] : memref<128x128xf32, #tpu.memory_space<vmem>>, vector<128x128xf32>
    %c0_42 = arith.constant 0 : index
    %c0_43 = arith.constant 0 : index
    %62 = vector.load %arg13[%c0_42, %c0_43] : memref<1x128xf32, #tpu.memory_space<vmem>>, vector<1x128xf32>
    %cst_44 = arith.constant dense<0.000000e+00> : vector<8x128xf32>
    %63 = tpu.matmul %60, %61, %cst_44 {dimension_numbers = #tpu.dot_dimension_numbers<[1], [0], [0], [1], [0, 0, 1, 1], [], []>} : vector<8x128xf32>, vector<128x128xf32>, vector<8x128xf32> -> vector<8x128xf32>
    %64 = vector.broadcast %62 : vector<1x128xf32> to vector<8x128xf32>
    %65 = arith.addf %63, %64 : vector<8x128xf32>
    %cst_45 = arith.constant 5.000000e-01 : f32
    %66 = vector.broadcast %cst_45 : f32 to vector<8x128xf32>
    %67 = arith.mulf %66, %65 : vector<8x128xf32>
    %68 = math.tanh %67 : vector<8x128xf32>
    %cst_46 = arith.constant 5.000000e-01 : f32
    %69 = vector.broadcast %cst_46 : f32 to vector<8x128xf32>
    %70 = arith.mulf %69, %68 : vector<8x128xf32>
    %cst_47 = arith.constant 5.000000e-01 : f32
    %71 = vector.broadcast %cst_47 : f32 to vector<8x128xf32>
    %72 = arith.addf %70, %71 : vector<8x128xf32>
    %c0_48 = arith.constant 0 : index
    %c0_49 = arith.constant 0 : index
    %73 = vector.load %arg14[%c0_48, %c0_49] : memref<128x128xf32, #tpu.memory_space<vmem>>, vector<128x128xf32>
    %c0_50 = arith.constant 0 : index
    %c0_51 = arith.constant 0 : index
    %74 = vector.load %arg15[%c0_50, %c0_51] : memref<1x128xf32, #tpu.memory_space<vmem>>, vector<1x128xf32>
    %cst_52 = arith.constant dense<0.000000e+00> : vector<8x128xf32>
    %75 = tpu.matmul %72, %73, %cst_52 {dimension_numbers = #tpu.dot_dimension_numbers<[1], [0], [0], [1], [0, 0, 1, 1], [], []>} : vector<8x128xf32>, vector<128x128xf32>, vector<8x128xf32> -> vector<8x128xf32>
    %76 = vector.broadcast %74 : vector<1x128xf32> to vector<8x128xf32>
    %77 = arith.addf %75, %76 : vector<8x128xf32>
    %cst_53 = arith.constant 5.000000e-01 : f32
    %78 = vector.broadcast %cst_53 : f32 to vector<8x128xf32>
    %79 = arith.mulf %78, %77 : vector<8x128xf32>
    %80 = math.tanh %79 : vector<8x128xf32>
    %cst_54 = arith.constant 5.000000e-01 : f32
    %81 = vector.broadcast %cst_54 : f32 to vector<8x128xf32>
    %82 = arith.mulf %81, %80 : vector<8x128xf32>
    %cst_55 = arith.constant 5.000000e-01 : f32
    %83 = vector.broadcast %cst_55 : f32 to vector<8x128xf32>
    %84 = arith.addf %82, %83 : vector<8x128xf32>
    %c0_56 = arith.constant 0 : index
    %c0_57 = arith.constant 0 : index
    %85 = vector.load %arg16[%c0_56, %c0_57] : memref<128x128xf32, #tpu.memory_space<vmem>>, vector<128x128xf32>
    %c0_58 = arith.constant 0 : index
    %c0_59 = arith.constant 0 : index
    %86 = vector.load %arg17[%c0_58, %c0_59] : memref<1x128xf32, #tpu.memory_space<vmem>>, vector<1x128xf32>
    %cst_60 = arith.constant dense<0.000000e+00> : vector<8x128xf32>
    %87 = tpu.matmul %84, %85, %cst_60 {dimension_numbers = #tpu.dot_dimension_numbers<[1], [0], [0], [1], [0, 0, 1, 1], [], []>} : vector<8x128xf32>, vector<128x128xf32>, vector<8x128xf32> -> vector<8x128xf32>
    %88 = vector.broadcast %86 : vector<1x128xf32> to vector<8x128xf32>
    %89 = arith.addf %87, %88 : vector<8x128xf32>
    %cst_61 = arith.constant 5.000000e-01 : f32
    %90 = vector.broadcast %cst_61 : f32 to vector<8x128xf32>
    %91 = arith.mulf %90, %89 : vector<8x128xf32>
    %92 = math.tanh %91 : vector<8x128xf32>
    %cst_62 = arith.constant 5.000000e-01 : f32
    %93 = vector.broadcast %cst_62 : f32 to vector<8x128xf32>
    %94 = arith.mulf %93, %92 : vector<8x128xf32>
    %cst_63 = arith.constant 5.000000e-01 : f32
    %95 = vector.broadcast %cst_63 : f32 to vector<8x128xf32>
    %96 = arith.addf %94, %95 : vector<8x128xf32>
    %c0_64 = arith.constant 0 : index
    %c0_65 = arith.constant 0 : index
    %97 = vector.load %arg18[%c0_64, %c0_65] : memref<128x64xf32, #tpu.memory_space<vmem>>, vector<128x64xf32>
    %c0_66 = arith.constant 0 : index
    %c0_67 = arith.constant 0 : index
    %98 = vector.load %arg19[%c0_66, %c0_67] : memref<1x64xf32, #tpu.memory_space<vmem>>, vector<1x64xf32>
    %cst_68 = arith.constant dense<0.000000e+00> : vector<8x64xf32>
    %99 = tpu.matmul %96, %97, %cst_68 {dimension_numbers = #tpu.dot_dimension_numbers<[1], [0], [0], [1], [0, 0, 1, 1], [], []>} : vector<8x128xf32>, vector<128x64xf32>, vector<8x64xf32> -> vector<8x64xf32>
    %100 = vector.broadcast %98 : vector<1x64xf32> to vector<8x64xf32>
    %101 = arith.addf %99, %100 : vector<8x64xf32>
    %c0_69 = arith.constant 0 : index
    %c0_70 = arith.constant 0 : index
    %102 = vector.load %arg20[%c0_69, %c0_70] : memref<8x64xf32, #tpu.memory_space<vmem>>, vector<8x64xf32>
    tpu.vector_store %arg20[%c0_69, %c0_70], %101 {strides = array<i32>} : memref<8x64xf32, #tpu.memory_space<vmem>>, vector<8x64xf32>,
    return
  }
  func.func @transform_0(%arg0: i32) -> (i32, i32) {
    %c0_i32 = arith.constant 0 : i32
    %c0_i32_0 = arith.constant 0 : i32
    return %arg0, %c0_i32 : i32, i32
  }
  func.func @transform_1(%arg0: i32) -> (i32, i32) {
    %c0_i32 = arith.constant 0 : i32
    %c0_i32_0 = arith.constant 0 : i32
    %c0_i32_1 = arith.constant 0 : i32
    return %c0_i32, %c0_i32_0 : i32, i32
  }
  func.func @transform_2(%arg0: i32) -> (i32, i32) {
    %c0_i32 = arith.constant 0 : i32
    %c0_i32_0 = arith.constant 0 : i32
    %c0_i32_1 = arith.constant 0 : i32
    return %c0_i32, %c0_i32_0 : i32, i32
  }
  func.func @transform_3(%arg0: i32) -> (i32, i32) {
    %c0_i32 = arith.constant 0 : i32
    %c0_i32_0 = arith.constant 0 : i32
    %c0_i32_1 = arith.constant 0 : i32
    return %c0_i32, %c0_i32_0 : i32, i32
  }
  func.func @transform_4(%arg0: i32) -> (i32, i32) {
    %c0_i32 = arith.constant 0 : i32
    %c0_i32_0 = arith.constant 0 : i32
    %c0_i32_1 = arith.constant 0 : i32
    return %c0_i32, %c0_i32_0 : i32, i32
  }
  func.func @transform_5(%arg0: i32) -> (i32, i32) {
    %c0_i32 = arith.constant 0 : i32
    %c0_i32_0 = arith.constant 0 : i32
    %c0_i32_1 = arith.constant 0 : i32
    return %c0_i32, %c0_i32_0 : i32, i32
  }
  func.func @transform_6(%arg0: i32) -> (i32, i32) {
    %c0_i32 = arith.constant 0 : i32
    %c0_i32_0 = arith.constant 0 : i32
    %c0_i32_1 = arith.constant 0 : i32
    return %c0_i32, %c0_i32_0 : i32, i32
  }
  func.func @transform_7(%arg0: i32) -> (i32, i32) {
    %c0_i32 = arith.constant 0 : i32
    %c0_i32_0 = arith.constant 0 : i32
    %c0_i32_1 = arith.constant 0 : i32
    return %c0_i32, %c0_i32_0 : i32, i32
  }
  func.func @transform_8(%arg0: i32) -> (i32, i32) {
    %c0_i32 = arith.constant 0 : i32
    %c0_i32_0 = arith.constant 0 : i32
    %c0_i32_1 = arith.constant 0 : i32
    return %c0_i32, %c0_i32_0 : i32, i32
  }
  func.func @transform_9(%arg0: i32) -> (i32, i32) {
    %c0_i32 = arith.constant 0 : i32
    %c0_i32_0 = arith.constant 0 : i32
    %c0_i32_1 = arith.constant 0 : i32
    return %c0_i32, %c0_i32_0 : i32, i32
  }
  func.func @transform_10(%arg0: i32) -> (i32, i32) {
    %c0_i32 = arith.constant 0 : i32
    %c0_i32_0 = arith.constant 0 : i32
    %c0_i32_1 = arith.constant 0 : i32
    return %c0_i32, %c0_i32_0 : i32, i32
  }
  func.func @transform_11(%arg0: i32) -> (i32, i32) {
    %c0_i32 = arith.constant 0 : i32
    %c0_i32_0 = arith.constant 0 : i32
    %c0_i32_1 = arith.constant 0 : i32
    return %c0_i32, %c0_i32_0 : i32, i32
  }
  func.func @transform_12(%arg0: i32) -> (i32, i32) {
    %c0_i32 = arith.constant 0 : i32
    %c0_i32_0 = arith.constant 0 : i32
    %c0_i32_1 = arith.constant 0 : i32
    return %c0_i32, %c0_i32_0 : i32, i32
  }
  func.func @transform_13(%arg0: i32) -> (i32, i32) {
    %c0_i32 = arith.constant 0 : i32
    %c0_i32_0 = arith.constant 0 : i32
    %c0_i32_1 = arith.constant 0 : i32
    return %c0_i32, %c0_i32_0 : i32, i32
  }
  func.func @transform_14(%arg0: i32) -> (i32, i32) {
    %c0_i32 = arith.constant 0 : i32
    %c0_i32_0 = arith.constant 0 : i32
    %c0_i32_1 = arith.constant 0 : i32
    return %c0_i32, %c0_i32_0 : i32, i32
  }
  func.func @transform_15(%arg0: i32) -> (i32, i32) {
    %c0_i32 = arith.constant 0 : i32
    %c0_i32_0 = arith.constant 0 : i32
    %c0_i32_1 = arith.constant 0 : i32
    return %c0_i32, %c0_i32_0 : i32, i32
  }
  func.func @transform_16(%arg0: i32) -> (i32, i32) {
    %c0_i32 = arith.constant 0 : i32
    %c0_i32_0 = arith.constant 0 : i32
    %c0_i32_1 = arith.constant 0 : i32
    return %c0_i32, %c0_i32_0 : i32, i32
  }
  func.func @transform_17(%arg0: i32) -> (i32, i32) {
    %c0_i32 = arith.constant 0 : i32
    %c0_i32_0 = arith.constant 0 : i32
    %c0_i32_1 = arith.constant 0 : i32
    return %c0_i32, %c0_i32_0 : i32, i32
  }
  func.func @transform_18(%arg0: i32) -> (i32, i32) {
    %c0_i32 = arith.constant 0 : i32
    %c0_i32_0 = arith.constant 0 : i32
    %c0_i32_1 = arith.constant 0 : i32
    return %c0_i32, %c0_i32_0 : i32, i32
  }
  func.func @transform_19(%arg0: i32) -> (i32, i32) {
    %c0_i32 = arith.constant 0 : i32
    %c0_i32_0 = arith.constant 0 : i32
    return %arg0, %c0_i32 : i32, i32
  }
}

</mosaic_0001>

<llo_original>
// kernel: tpu_custom_call.1
$region0: #{tpu_custom_call.1}
  #allocation0 [shape = 'u32[]', space=smem, size = 0x4, offset = 0x4, fixed_abs, tag = 'smem constant byte address 0x4 - core index']
  #allocation1 [shape = 'u32[144,128]{1,0:T(1,128)}', space=vmem, size = 0x12000, scoped, tag = 'internal scratch']
  %s0 = inlined_call_operand.vmem [shape: f32[8,128], index: 0, kind: input, shape index: {}]
  %s1 = inlined_call_operand.vmem [shape: f32[128,128], index: 1, kind: input, shape index: {}]
  %s2 = inlined_call_operand.vmem [shape: f32[1,128], index: 2, kind: input, shape index: {}]
  %s3 = inlined_call_operand.hbm [shape: f32[128,128], index: 3, kind: input, shape index: {}]
  %s4 = inlined_call_operand.vmem [shape: f32[1,128], index: 4, kind: input, shape index: {}]
  %s5 = inlined_call_operand.hbm [shape: f32[128,128], index: 5, kind: input, shape index: {}]
  %s6 = inlined_call_operand.vmem [shape: f32[1,128], index: 6, kind: input, shape index: {}]
  %s7 = inlined_call_operand.hbm [shape: f32[128,128], index: 7, kind: input, shape index: {}]
  %s8 = inlined_call_operand.vmem [shape: f32[1,128], index: 8, kind: input, shape index: {}]
  %s9 = inlined_call_operand.hbm [shape: f32[128,128], index: 9, kind: input, shape index: {}]
  %s10 = inlined_call_operand.vmem [shape: f32[1,128], index: 10, kind: input, shape index: {}]
  %s11 = inlined_call_operand.hbm [shape: f32[128,128], index: 11, kind: input, shape index: {}]
  %s12 = inlined_call_operand.vmem [shape: f32[1,128], index: 12, kind: input, shape index: {}]
  %s13 = inlined_call_operand.hbm [shape: f32[128,128], index: 13, kind: input, shape index: {}]
  %s14 = inlined_call_operand.vmem [shape: f32[1,128], index: 14, kind: input, shape index: {}]
  %s15 = inlined_call_operand.hbm [shape: f32[128,128], index: 15, kind: input, shape index: {}]
  %s16 = inlined_call_operand.vmem [shape: f32[1,128], index: 16, kind: input, shape index: {}]
  %s17 = inlined_call_operand.vmem [shape: f32[128,64], index: 17, kind: input, shape index: {}]
  %s18 = inlined_call_operand.vmem [shape: f32[1,64], index: 18, kind: input, shape index: {}]
  %s19 = inlined_call_operand.hbm [shape: f32[8,64], index: 19, kind: output, shape index: {}]
  %s20 = sld [smem:[#allocation0]]
  $region114: #{tpu_custom_call.1} parent=0
    _
  %s22 = ssub.s32 1, %s20
  %s23 = scalar_select 0, %s22, %s20
  $region1: #{tpu_custom_call.1} parent=0
    #allocation2 [shape = 'u8[65536]{0}', space=vmem, size = 0x10000, scoped, tag = 'input window, operand 3, single buffered']
    #allocation3 [shape = 's32[1]{0}', space=sflag, size = 0x4, scoped, tag = 'scoped memory for tpu_custom_call.1']
    #allocation4 [shape = 's32[1]{0}', space=sflag, size = 0x4, scoped, tag = 'scoped memory for tpu_custom_call.1']
    #allocation5 [shape = 'u8[65536]{0}', space=vmem, size = 0x10000, scoped, tag = 'input window, operand 5, single buffered']
    #allocation6 [shape = 's32[1]{0}', space=sflag, size = 0x4, scoped, tag = 'scoped memory for tpu_custom_call.1']
    #allocation7 [shape = 'u8[65536]{0}', space=vmem, size = 0x10000, scoped, tag = 'input window, operand 7, single buffered']
    #allocation8 [shape = 'u8[65536]{0}', space=vmem, size = 0x10000, scoped, tag = 'input window, operand 9, single buffered']
    #allocation9 [shape = 's32[1]{0}', space=sflag, size = 0x4, scoped, tag = 'scoped memory for tpu_custom_call.1']
    #allocation10 [shape = 'u8[65536]{0}', space=vmem, size = 0x10000, scoped, tag = 'input window, operand 11, single buffered']
    #allocation11 [shape = 'u8[65536]{0}', space=vmem, size = 0x10000, scoped, tag = 'input window, operand 13, single buffered']
    #allocation12 [shape = 's32[1]{0}', space=sflag, size = 0x4, scoped, tag = 'scoped memory for tpu_custom_call.1']
    #allocation13 [shape = 'u8[65536]{0}', space=vmem, size = 0x10000, scoped, tag = 'input window, operand 15, single buffered']
    #allocation14 [shape = 'u8[4096]{0}', space=vmem, size = 0x1000, scoped, tag = 'output window, operand 0, single buffered']
    %24 = vsyncpa [#allocation3], 0
    %25 = vsyncpa [#allocation6], 0
    %26 = vsyncpa [#allocation9], 0
    %27 = vsyncpa [#allocation12], 0
    %28 = vsyncpa [#allocation4], 0
    // Predicated region
    $region2: #{tpu_custom_call.1} parent=1 // pred_check
      _
    $region3: #{tpu_custom_call.1} parent=1 // pred_check_branch
      %30 = sbr.rel (0) target = $region5
    $region4: #{tpu_custom_call.1} parent=1 // pred_region
      _
    $region5: #{tpu_custom_call.1} parent=1 // pred_fallthru
      _
    // Predicated region
    $region6: #{tpu_custom_call.1} parent=1 // pred_check
      _
    $region7: #{tpu_custom_call.1} parent=1 // pred_check_branch
      %32 = sbr.rel (0) target = $region9
    $region8: #{tpu_custom_call.1} parent=1 // pred_region
      _
    $region9: #{tpu_custom_call.1} parent=1 // pred_fallthru
      _
    // Predicated region
    $region10: #{tpu_custom_call.1} parent=1 // pred_check
      _
    $region11: #{tpu_custom_call.1} parent=1 // pred_check_branch
      %34 = sbr.rel (0) target = $region13
    $region12: #{tpu_custom_call.1} parent=1 // pred_region
      _
    $region13: #{tpu_custom_call.1} parent=1 // pred_fallthru
      _
    // Predicated region
    $region14: #{tpu_custom_call.1} parent=1 // pred_check
      _
    $region15: #{tpu_custom_call.1} parent=1 // pred_check_branch
      %36 = sbr.rel (0) target = $region17
    $region16: #{tpu_custom_call.1} parent=1 // pred_region
      %s38 = ssub.s32 2048, 2048
      %39 = vsyncadd [#allocation3], %s38
      %s40 = sshll.u32 [#allocation2], 4
      %s41 = int_to_ptr.vmem [resolvable:$true] %s40
      %46 = dma.hbm_to_vmem [thread:$0]  %s3, 2048, %s41, [#allocation3], 128, 128, 8
    $region17: #{tpu_custom_call.1} parent=1 // pred_fallthru
      _
    // Predicated region
    $region18: #{tpu_custom_call.1} parent=1 // pred_check
      _
    $region19: #{tpu_custom_call.1} parent=1 // pred_check_branch
      %48 = sbr.rel (0) target = $region21
    $region20: #{tpu_custom_call.1} parent=1 // pred_region
      _
    $region21: #{tpu_custom_call.1} parent=1 // pred_fallthru
      _
    // Predicated region
    $region22: #{tpu_custom_call.1} parent=1 // pred_check
      _
    $region23: #{tpu_custom_call.1} parent=1 // pred_check_branch
      %50 = sbr.rel (0) target = $region25
    $region24: #{tpu_custom_call.1} parent=1 // pred_region
      %s52 = ssub.s32 2048, 2048
      %53 = vsyncadd [#allocation6], %s52
      %s54 = sshll.u32 [#allocation5], 4
      %s55 = int_to_ptr.vmem [resolvable:$true] %s54
      %60 = dma.hbm_to_vmem [thread:$0]  %s5, 2048, %s55, [#allocation6], 128, 128, 8
    $region25: #{tpu_custom_call.1} parent=1 // pred_fallthru
      _
    // Predicated region
    $region26: #{tpu_custom_call.1} parent=1 // pred_check
      _
    $region27: #{tpu_custom_call.1} parent=1 // pred_check_branch
      %62 = sbr.rel (0) target = $region29
    $region28: #{tpu_custom_call.1} parent=1 // pred_region
      _
    $region29: #{tpu_custom_call.1} parent=1 // pred_fallthru
      _
    // Predicated region
    $region30: #{tpu_custom_call.1} parent=1 // pred_check
      _
    $region31: #{tpu_custom_call.1} parent=1 // pred_check_branch
      %64 = sbr.rel (0) target = $region33
    $region32: #{tpu_custom_call.1} parent=1 // pred_region
      %s66 = ssub.s32 2048, 2048
      %67 = vsyncadd [#allocation6], %s66
      %s68 = sshll.u32 [#allocation7], 4
      %s69 = int_to_ptr.vmem [resolvable:$true] %s68
      %74 = dma.hbm_to_vmem [thread:$0]  %s7, 2048, %s69, [#allocation6], 128, 128, 8
    $region33: #{tpu_custom_call.1} parent=1 // pred_fallthru
      _
    // Predicated region
    $region34: #{tpu_custom_call.1} parent=1 // pred_check
      _
    $region35: #{tpu_custom_call.1} parent=1 // pred_check_branch
      %76 = sbr.rel (0) target = $region37
    $region36: #{tpu_custom_call.1} parent=1 // pred_region
      _
    $region37: #{tpu_custom_call.1} parent=1 // pred_fallthru
      _
    // Predicated region
    $region38: #{tpu_custom_call.1} parent=1 // pred_check
      _
    $region39: #{tpu_custom_call.1} parent=1 // pred_check_branch
      %78 = sbr.rel (0) target = $region41
    $region40: #{tpu_custom_call.1} parent=1 // pred_region
      %s80 = ssub.s32 2048, 2048
      %81 = vsyncadd [#allocation9], %s80
      %s82 = sshll.u32 [#allocation8], 4
      %s83 = int_to_ptr.vmem [resolvable:$true] %s82
      %88 = dma.hbm_to_vmem [thread:$0]  %s9, 2048, %s83, [#allocation9], 128, 128, 8
    $region41: #{tpu_custom_call.1} parent=1 // pred_fallthru
      _
    // Predicated region
    $region42: #{tpu_custom_call.1} parent=1 // pred_check
      _
    $region43: #{tpu_custom_call.1} parent=1 // pred_check_branch
      %90 = sbr.rel (0) target = $region45
    $region44: #{tpu_custom_call.1} parent=1 // pred_region
      _
    $region45: #{tpu_custom_call.1} parent=1 // pred_fallthru
      _
    // Predicated region
    $region46: #{tpu_custom_call.1} parent=1 // pred_check
      _
    $region47: #{tpu_custom_call.1} parent=1 // pred_check_branch
      %92 = sbr.rel (0) target = $region49
    $region48: #{tpu_custom_call.1} parent=1 // pred_region
      %s94 = ssub.s32 2048, 2048
      %95 = vsyncadd [#allocation9], %s94
      %s96 = sshll.u32 [#allocation10], 4
      %s97 = int_to_ptr.vmem [resolvable:$true] %s96
      %102 = dma.hbm_to_vmem [thread:$0]  %s11, 2048, %s97, [#allocation9], 128, 128, 8
    $region49: #{tpu_custom_call.1} parent=1 // pred_fallthru
      _
    // Predicated region
    $region50: #{tpu_custom_call.1} parent=1 // pred_check
      _
    $region51: #{tpu_custom_call.1} parent=1 // pred_check_branch
      %104 = sbr.rel (0) target = $region53
    $region52: #{tpu_custom_call.1} parent=1 // pred_region
      _
    $region53: #{tpu_custom_call.1} parent=1 // pred_fallthru
      _
    // Predicated region
    $region54: #{tpu_custom_call.1} parent=1 // pred_check
      _
    $region55: #{tpu_custom_call.1} parent=1 // pred_check_branch
      %106 = sbr.rel (0) target = $region57
    $region56: #{tpu_custom_call.1} parent=1 // pred_region
      %s108 = ssub.s32 2048, 2048
      %109 = vsyncadd [#allocation12], %s108
      %s110 = sshll.u32 [#allocation11], 4
      %s111 = int_to_ptr.vmem [resolvable:$true] %s110
      %116 = dma.hbm_to_vmem [thread:$0]  %s13, 2048, %s111, [#allocation12], 128, 128, 8
    $region57: #{tpu_custom_call.1} parent=1 // pred_fallthru
      _
    // Predicated region
    $region58: #{tpu_custom_call.1} parent=1 // pred_check
      _
    $region59: #{tpu_custom_call.1} parent=1 // pred_check_branch
      %118 = sbr.rel (0) target = $region61
    $region60: #{tpu_custom_call.1} parent=1 // pred_region
      _
    $region61: #{tpu_custom_call.1} parent=1 // pred_fallthru
      _
    // Predicated region
    $region62: #{tpu_custom_call.1} parent=1 // pred_check
      _
    $region63: #{tpu_custom_call.1} parent=1 // pred_check_branch
      %120 = sbr.rel (0) target = $region65
    $region64: #{tpu_custom_call.1} parent=1 // pred_region
      %s122 = ssub.s32 2048, 2048
      %123 = vsyncadd [#allocation12], %s122
      %s124 = sshll.u32 [#allocation13], 4
      %s125 = int_to_ptr.vmem [resolvable:$true] %s124
      %130 = dma.hbm_to_vmem [thread:$0]  %s15, 2048, %s125, [#allocation12], 128, 128, 8
    $region65: #{tpu_custom_call.1} parent=1 // pred_fallthru
      _
    // Predicated region
    $region66: #{tpu_custom_call.1} parent=1 // pred_check
      _
    $region67: #{tpu_custom_call.1} parent=1 // pred_check_branch
      %132 = sbr.rel (0) target = $region69
    $region68: #{tpu_custom_call.1} parent=1 // pred_region
      _
    $region69: #{tpu_custom_call.1} parent=1 // pred_fallthru
      _
    // Predicated region
    $region70: #{tpu_custom_call.1} parent=1 // pred_check
      _
    $region71: #{tpu_custom_call.1} parent=1 // pred_check_branch
      %134 = sbr.rel (0) target = $region73
    $region72: #{tpu_custom_call.1} parent=1 // pred_region
      _
    $region73: #{tpu_custom_call.1} parent=1 // pred_fallthru
      _
    // Predicated region
    $region74: #{tpu_custom_call.1} parent=1 // pred_check
      _
    $region75: #{tpu_custom_call.1} parent=1 // pred_check_branch
      %136 = sbr.rel (0) target = $region77
    $region76: #{tpu_custom_call.1} parent=1 // pred_region
      _
    $region77: #{tpu_custom_call.1} parent=1 // pred_fallthru
      _
    // Predicated region
    $region78: #{tpu_custom_call.1} parent=1 // pred_check
      _
    $region79: #{tpu_custom_call.1} parent=1 // pred_check_branch
      %138 = sbr.rel (0) target = $region81
    $region80: #{tpu_custom_call.1} parent=1 // pred_region
      %139 = dma.done [#allocation3], 2048
    $region81: #{tpu_custom_call.1} parent=1 // pred_fallthru
      _
    // Predicated region
    $region82: #{tpu_custom_call.1} parent=1 // pred_check
      _
    $region83: #{tpu_custom_call.1} parent=1 // pred_check_branch
      %141 = sbr.rel (0) target = $region85
    $region84: #{tpu_custom_call.1} parent=1 // pred_region
      %142 = dma.done [#allocation6], 2048
    $region85: #{tpu_custom_call.1} parent=1 // pred_fallthru
      _
    // Predicated region
    $region86: #{tpu_custom_call.1} parent=1 // pred_check
      _
    $region87: #{tpu_custom_call.1} parent=1 // pred_check_branch
      %144 = sbr.rel (0) target = $region89
    $region88: #{tpu_custom_call.1} parent=1 // pred_region
      %145 = dma.done [#allocation6], 2048
    $region89: #{tpu_custom_call.1} parent=1 // pred_fallthru
      _
    // Predicated region
    $region90: #{tpu_custom_call.1} parent=1 // pred_check
      _
    $region91: #{tpu_custom_call.1} parent=1 // pred_check_branch
      %147 = sbr.rel (0) target = $region93
    $region92: #{tpu_custom_call.1} parent=1 // pred_region
      %148 = dma.done [#allocation9], 2048
    $region93: #{tpu_custom_call.1} parent=1 // pred_fallthru
      _
    // Predicated region
    $region94: #{tpu_custom_call.1} parent=1 // pred_check
      _
    $region95: #{tpu_custom_call.1} parent=1 // pred_check_branch
      %150 = sbr.rel (0) target = $region97
    $region96: #{tpu_custom_call.1} parent=1 // pred_region
      %151 = dma.done [#allocation9], 2048
    $region97: #{tpu_custom_call.1} parent=1 // pred_fallthru
      _
    // Predicated region
    $region98: #{tpu_custom_call.1} parent=1 // pred_check
      _
    $region99: #{tpu_custom_call.1} parent=1 // pred_check_branch
      %153 = sbr.rel (0) target = $region101
    $region100: #{tpu_custom_call.1} parent=1 // pred_region
      %154 = dma.done [#allocation12], 2048
    $region101: #{tpu_custom_call.1} parent=1 // pred_fallthru
      _
    // Predicated region
    $region102: #{tpu_custom_call.1} parent=1 // pred_check
      _
    $region103: #{tpu_custom_call.1} parent=1 // pred_check_branch
      %156 = sbr.rel (0) target = $region105
    $region104: #{tpu_custom_call.1} parent=1 // pred_region
      %157 = dma.done [#allocation12], 2048
    $region105: #{tpu_custom_call.1} parent=1 // pred_fallthru
      _
    %v158 = vld [vmem:[%s0] sm:$0xff]
    %v159 = vld [vmem:[%s1] sm:$0xff]
    %v160 = vld [vmem:[%s1 + $0x8] sm:$0xff]
    %v161 = vld [vmem:[%s1 + $0x10] sm:$0xff]
    %v162 = vld [vmem:[%s1 + $0x18] sm:$0xff]
    %v163 = vld [vmem:[%s1 + $0x20] sm:$0xff]
    %v164 = vld [vmem:[%s1 + $0x28] sm:$0xff]
    %v165 = vld [vmem:[%s1 + $0x30] sm:$0xff]
    %v166 = vld [vmem:[%s1 + $0x38] sm:$0xff]
    %v167 = vld [vmem:[%s1 + $0x40] sm:$0xff]
    %v168 = vld [vmem:[%s1 + $0x48] sm:$0xff]
    %v169 = vld [vmem:[%s1 + $0x50] sm:$0xff]
    %v170 = vld [vmem:[%s1 + $0x58] sm:$0xff]
    %v171 = vld [vmem:[%s1 + $0x60] sm:$0xff]
    %v172 = vld [vmem:[%s1 + $0x68] sm:$0xff]
    %v173 = vld [vmem:[%s1 + $0x70] sm:$0xff]
    %v174 = vld [vmem:[%s1 + $0x78] sm:$0xff]
    %v175 = vld [vmem:[%s2] sm:$0x1]
    %v177 = vlaneseq
    %v178 = vshrl.u32 %v177, 7
    %v179 = vsub.s32 0, %v178
    %v180 = vrot.slane %v175, %v179
    %182 = vmatprep.subr.mxu0 0.0
    %183 = vmatpush1.msra.mxu0 %v174
    %184 = vmatprep.subr.mxu0 0.0
    %185 = vmatpush1.msra.mxu0 %v173
    %186 = vmatprep.subr.mxu0 0.0
    %187 = vmatpush1.msra.mxu0 %v172
    %188 = vmatprep.subr.mxu0 0.0
    %189 = vmatpush1.msra.mxu0 %v171
    %190 = vmatprep.subr.mxu0 0.0
    %191 = vmatpush1.msra.mxu0 %v170
    %192 = vmatprep.subr.mxu0 0.0
    %193 = vmatpush1.msra.mxu0 %v169
    %194 = vmatprep.subr.mxu0 0.0
    %195 = vmatpush1.msra.mxu0 %v168
    %196 = vmatprep.subr.mxu0 0.0
    %197 = vmatpush1.msra.mxu0 %v167
    %198 = vmatprep.subr.mxu0 0.0
    %199 = vmatpush1.msra.mxu0 %v166
    %200 = vmatprep.subr.mxu0 0.0
    %201 = vmatpush1.msra.mxu0 %v165
    %202 = vmatprep.subr.mxu0 0.0
    %203 = vmatpush1.msra.mxu0 %v164
    %204 = vmatprep.subr.mxu0 0.0
    %205 = vmatpush1.msra.mxu0 %v163
    %206 = vmatprep.subr.mxu0 0.0
    %207 = vmatpush1.msra.mxu0 %v162
    %208 = vmatprep.subr.mxu0 0.0
    %209 = vmatpush1.msra.mxu0 %v161
    %210 = vmatprep.subr.mxu0 0.0
    %211 = vmatpush1.msra.mxu0 %v160
    %212 = vmatprep.subr.mxu0 0.0
    %213 = vmatpush1.msra.mxu0 %v159
    %214 = vmatprep.subr.mxu0 0.0
    %215 = vmatpush2.msra.mxu0 0.0
    %216 = vmatprep.subr.mxu0 0.0
    %217 = vmatpush2.msra.mxu0 0.0
    %218 = vmatprep.subr.mxu0 0.0
    %219 = vmatpush2.msra.mxu0 0.0
    %220 = vmatprep.subr.mxu0 0.0
    %221 = vmatpush2.msra.mxu0 0.0
    %222 = vmatprep.subr.mxu0 0.0
    %223 = vmatpush2.msra.mxu0 0.0
    %224 = vmatprep.subr.mxu0 0.0
    %225 = vmatpush2.msra.mxu0 0.0
    %226 = vmatprep.subr.mxu0 0.0
    %227 = vmatpush2.msra.mxu0 0.0
    %228 = vmatprep.subr.mxu0 0.0
    %229 = vmatpush2.msra.mxu0 0.0
    %230 = vmatprep.subr.mxu0 0.0
    %231 = vmatpush2.msra.mxu0 0.0
    %232 = vmatprep.subr.mxu0 0.0
    %233 = vmatpush2.msra.mxu0 0.0
    %234 = vmatprep.subr.mxu0 0.0
    %235 = vmatpush2.msra.mxu0 0.0
    %236 = vmatprep.subr.mxu0 0.0
    %237 = vmatpush2.msra.mxu0 0.0
    %238 = vmatprep.subr.mxu0 0.0
    %239 = vmatpush2.msra.mxu0 0.0
    %240 = vmatprep.subr.mxu0 0.0
    %241 = vmatpush2.msra.mxu0 0.0
    %242 = vmatprep.subr.mxu0 0.0
    %243 = vmatpush2.msra.mxu0 0.0
    %244 = vmatprep.subr.mxu0 0.0
    %245 = vmatpush2.msra.mxu0 0.0
    %246 = vmatprep.mubr.f32.mxu0 0.0
    %247 = vmatmul.mubr.f32.gmra.mxu0 %v158
    %v248 = vpop.f32.mrf.mxu0
    %v249 = vadd.f32 %v180, %v248
    %v250 = vpop.f32.mrf.mxu0
    %251 = vdwg.mxu0
    %v252 = vmul.f32 %v249, 0.5
    %v253 = vtanh.pop %v252
    %v254 = vmul.f32 %v253, 0.5
    %v255 = vadd.f32 %v254, 0.5
    %v256 = vld [vmem:[#allocation2] sm:$0xff]
    %v257 = vld [vmem:[#allocation2 + $0x8] sm:$0xff]
    %v258 = vld [vmem:[#allocation2 + $0x10] sm:$0xff]
    %v259 = vld [vmem:[#allocation2 + $0x18] sm:$0xff]
    %v260 = vld [vmem:[#allocation2 + $0x20] sm:$0xff]
    %v261 = vld [vmem:[#allocation2 + $0x28] sm:$0xff]
    %v262 = vld [vmem:[#allocation2 + $0x30] sm:$0xff]
    %v263 = vld [vmem:[#allocation2 + $0x38] sm:$0xff]
    %v264 = vld [vmem:[#allocation2 + $0x40] sm:$0xff]
    %v265 = vld [vmem:[#allocation2 + $0x48] sm:$0xff]
    %v266 = vld [vmem:[#allocation2 + $0x50] sm:$0xff]
    %v267 = vld [vmem:[#allocation2 + $0x58] sm:$0xff]
    %v268 = vld [vmem:[#allocation2 + $0x60] sm:$0xff]
    %v269 = vld [vmem:[#allocation2 + $0x68] sm:$0xff]
    %v270 = vld [vmem:[#allocation2 + $0x70] sm:$0xff]
    %v271 = vld [vmem:[#allocation2 + $0x78] sm:$0xff]
    %v272 = vld [vmem:[%s4] sm:$0x1]
    %v274 = vlaneseq
    %v275 = vshrl.u32 %v274, 7
    %v276 = vsub.s32 0, %v275
    %v277 = vrot.slane %v272, %v276
    %279 = vmatprep.subr.mxu0 0.0
    %280 = vmatpush1.msra.mxu0 %v271
    %281 = vmatprep.subr.mxu0 0.0
    %282 = vmatpush1.msra.mxu0 %v270
    %283 = vmatprep.subr.mxu0 0.0
    %284 = vmatpush1.msra.mxu0 %v269
    %285 = vmatprep.subr.mxu0 0.0
    %286 = vmatpush1.msra.mxu0 %v268
    %287 = vmatprep.subr.mxu0 0.0
    %288 = vmatpush1.msra.mxu0 %v267
    %289 = vmatprep.subr.mxu0 0.0
    %290 = vmatpush1.msra.mxu0 %v266
    %291 = vmatprep.subr.mxu0 0.0
    %292 = vmatpush1.msra.mxu0 %v265
    %293 = vmatprep.subr.mxu0 0.0
    %294 = vmatpush1.msra.mxu0 %v264
    %295 = vmatprep.subr.mxu0 0.0
    %296 = vmatpush1.msra.mxu0 %v263
    %297 = vmatprep.subr.mxu0 0.0
    %298 = vmatpush1.msra.mxu0 %v262
    %299 = vmatprep.subr.mxu0 0.0
    %300 = vmatpush1.msra.mxu0 %v261
    %301 = vmatprep.subr.mxu0 0.0
    %302 = vmatpush1.msra.mxu0 %v260
    %303 = vmatprep.subr.mxu0 0.0
    %304 = vmatpush1.msra.mxu0 %v259
    %305 = vmatprep.subr.mxu0 0.0
    %306 = vmatpush1.msra.mxu0 %v258
    %307 = vmatprep.subr.mxu0 0.0
    %308 = vmatpush1.msra.mxu0 %v257
    %309 = vmatprep.subr.mxu0 0.0
    %310 = vmatpush1.msra.mxu0 %v256
    %311 = vmatprep.subr.mxu0 0.0
    %312 = vmatpush2.msra.mxu0 0.0
    %313 = vmatprep.subr.mxu0 0.0
    %314 = vmatpush2.msra.mxu0 0.0
    %315 = vmatprep.subr.mxu0 0.0
    %316 = vmatpush2.msra.mxu0 0.0
    %317 = vmatprep.subr.mxu0 0.0
    %318 = vmatpush2.msra.mxu0 0.0
    %319 = vmatprep.subr.mxu0 0.0
    %320 = vmatpush2.msra.mxu0 0.0
    %321 = vmatprep.subr.mxu0 0.0
    %322 = vmatpush2.msra.mxu0 0.0
    %323 = vmatprep.subr.mxu0 0.0
    %324 = vmatpush2.msra.mxu0 0.0
    %325 = vmatprep.subr.mxu0 0.0
    %326 = vmatpush2.msra.mxu0 0.0
    %327 = vmatprep.subr.mxu0 0.0
    %328 = vmatpush2.msra.mxu0 0.0
    %329 = vmatprep.subr.mxu0 0.0
    %330 = vmatpush2.msra.mxu0 0.0
    %331 = vmatprep.subr.mxu0 0.0
    %332 = vmatpush2.msra.mxu0 0.0
    %333 = vmatprep.subr.mxu0 0.0
    %334 = vmatpush2.msra.mxu0 0.0
    %335 = vmatprep.subr.mxu0 0.0
    %336 = vmatpush2.msra.mxu0 0.0
    %337 = vmatprep.subr.mxu0 0.0
    %338 = vmatpush2.msra.mxu0 0.0
    %339 = vmatprep.subr.mxu0 0.0
    %340 = vmatpush2.msra.mxu0 0.0
    %341 = vmatprep.subr.mxu0 0.0
    %342 = vmatpush2.msra.mxu0 0.0
    %343 = vmatprep.mubr.f32.mxu0 0.0
    %344 = vmatmul.mubr.f32.gmra.mxu0 %v255
    %v345 = vpop.f32.mrf.mxu0
    %v346 = vadd.f32 %v277, %v345
    %v347 = vpop.f32.mrf.mxu0
    %348 = vdwg.mxu0
    %v349 = vmul.f32 %v346, 0.5
    %v350 = vtanh.pop %v349
    %v351 = vmul.f32 %v350, 0.5
    %v352 = vadd.f32 %v351, 0.5
    %v353 = vld [vmem:[#allocation5] sm:$0xff]
    %v354 = vld [vmem:[#allocation5 + $0x8] sm:$0xff]
    %v355 = vld [vmem:[#allocation5 + $0x10] sm:$0xff]
    %v356 = vld [vmem:[#allocation5 + $0x18] sm:$0xff]
    %v357 = vld [vmem:[#allocation5 + $0x20] sm:$0xff]
    %v358 = vld [vmem:[#allocation5 + $0x28] sm:$0xff]
    %v359 = vld [vmem:[#allocation5 + $0x30] sm:$0xff]
    %v360 = vld [vmem:[#allocation5 + $0x38] sm:$0xff]
    %v361 = vld [vmem:[#allocation5 + $0x40] sm:$0xff]
    %v362 = vld [vmem:[#allocation5 + $0x48] sm:$0xff]
    %v363 = vld [vmem:[#allocation5 + $0x50] sm:$0xff]
    %v364 = vld [vmem:[#allocation5 + $0x58] sm:$0xff]
    %v365 = vld [vmem:[#allocation5 + $0x60] sm:$0xff]
    %v366 = vld [vmem:[#allocation5 + $0x68] sm:$0xff]
    %v367 = vld [vmem:[#allocation5 + $0x70] sm:$0xff]
    %v368 = vld [vmem:[#allocation5 + $0x78] sm:$0xff]
    %v369 = vld [vmem:[%s6] sm:$0x1]
    %v371 = vlaneseq
    %v372 = vshrl.u32 %v371, 7
    %v373 = vsub.s32 0, %v372
    %v374 = vrot.slane %v369, %v373
    %376 = vmatprep.subr.mxu0 0.0
    %377 = vmatpush1.msra.mxu0 %v368
    %378 = vmatprep.subr.mxu0 0.0
    %379 = vmatpush1.msra.mxu0 %v367
    %380 = vmatprep.subr.mxu0 0.0
    %381 = vmatpush1.msra.mxu0 %v366
    %382 = vmatprep.subr.mxu0 0.0
    %383 = vmatpush1.msra.mxu0 %v365
    %384 = vmatprep.subr.mxu0 0.0
    %385 = vmatpush1.msra.mxu0 %v364
    %386 = vmatprep.subr.mxu0 0.0
    %387 = vmatpush1.msra.mxu0 %v363
    %388 = vmatprep.subr.mxu0 0.0
    %389 = vmatpush1.msra.mxu0 %v362
    %390 = vmatprep.subr.mxu0 0.0
    %391 = vmatpush1.msra.mxu0 %v361
    %392 = vmatprep.subr.mxu0 0.0
    %393 = vmatpush1.msra.mxu0 %v360
    %394 = vmatprep.subr.mxu0 0.0
    %395 = vmatpush1.msra.mxu0 %v359
    %396 = vmatprep.subr.mxu0 0.0
    %397 = vmatpush1.msra.mxu0 %v358
    %398 = vmatprep.subr.mxu0 0.0
    %399 = vmatpush1.msra.mxu0 %v357
    %400 = vmatprep.subr.mxu0 0.0
    %401 = vmatpush1.msra.mxu0 %v356
    %402 = vmatprep.subr.mxu0 0.0
    %403 = vmatpush1.msra.mxu0 %v355
    %404 = vmatprep.subr.mxu0 0.0
    %405 = vmatpush1.msra.mxu0 %v354
    %406 = vmatprep.subr.mxu0 0.0
    %407 = vmatpush1.msra.mxu0 %v353
    %408 = vmatprep.subr.mxu0 0.0
    %409 = vmatpush2.msra.mxu0 0.0
    %410 = vmatprep.subr.mxu0 0.0
    %411 = vmatpush2.msra.mxu0 0.0
    %412 = vmatprep.subr.mxu0 0.0
    %413 = vmatpush2.msra.mxu0 0.0
    %414 = vmatprep.subr.mxu0 0.0
    %415 = vmatpush2.msra.mxu0 0.0
    %416 = vmatprep.subr.mxu0 0.0
    %417 = vmatpush2.msra.mxu0 0.0
    %418 = vmatprep.subr.mxu0 0.0
    %419 = vmatpush2.msra.mxu0 0.0
    %420 = vmatprep.subr.mxu0 0.0
    %421 = vmatpush2.msra.mxu0 0.0
    %422 = vmatprep.subr.mxu0 0.0
    %423 = vmatpush2.msra.mxu0 0.0
    %424 = vmatprep.subr.mxu0 0.0
    %425 = vmatpush2.msra.mxu0 0.0
    %426 = vmatprep.subr.mxu0 0.0
    %427 = vmatpush2.msra.mxu0 0.0
    %428 = vmatprep.subr.mxu0 0.0
    %429 = vmatpush2.msra.mxu0 0.0
    %430 = vmatprep.subr.mxu0 0.0
    %431 = vmatpush2.msra.mxu0 0.0
    %432 = vmatprep.subr.mxu0 0.0
    %433 = vmatpush2.msra.mxu0 0.0
    %434 = vmatprep.subr.mxu0 0.0
    %435 = vmatpush2.msra.mxu0 0.0
    %436 = vmatprep.subr.mxu0 0.0
    %437 = vmatpush2.msra.mxu0 0.0
    %438 = vmatprep.subr.mxu0 0.0
    %439 = vmatpush2.msra.mxu0 0.0
    %440 = vmatprep.mubr.f32.mxu0 0.0
    %441 = vmatmul.mubr.f32.gmra.mxu0 %v352
    %v442 = vpop.f32.mrf.mxu0
    %v443 = vadd.f32 %v374, %v442
    %v444 = vpop.f32.mrf.mxu0
    %445 = vdwg.mxu0
    %v446 = vmul.f32 %v443, 0.5
    %v447 = vtanh.pop %v446
    %v448 = vmul.f32 %v447, 0.5
    %v449 = vadd.f32 %v448, 0.5
    %v450 = vld [vmem:[#allocation7] sm:$0xff]
    %v451 = vld [vmem:[#allocation7 + $0x8] sm:$0xff]
    %v452 = vld [vmem:[#allocation7 + $0x10] sm:$0xff]
    %v453 = vld [vmem:[#allocation7 + $0x18] sm:$0xff]
    %v454 = vld [vmem:[#allocation7 + $0x20] sm:$0xff]
    %v455 = vld [vmem:[#allocation7 + $0x28] sm:$0xff]
    %v456 = vld [vmem:[#allocation7 + $0x30] sm:$0xff]
    %v457 = vld [vmem:[#allocation7 + $0x38] sm:$0xff]
    %v458 = vld [vmem:[#allocation7 + $0x40] sm:$0xff]
    %v459 = vld [vmem:[#allocation7 + $0x48] sm:$0xff]
    %v460 = vld [vmem:[#allocation7 + $0x50] sm:$0xff]
    %v461 = vld [vmem:[#allocation7 + $0x58] sm:$0xff]
    %v462 = vld [vmem:[#allocation7 + $0x60] sm:$0xff]
    %v463 = vld [vmem:[#allocation7 + $0x68] sm:$0xff]
    %v464 = vld [vmem:[#allocation7 + $0x70] sm:$0xff]
    %v465 = vld [vmem:[#allocation7 + $0x78] sm:$0xff]
    %v466 = vld [vmem:[%s8] sm:$0x1]
    %v468 = vlaneseq
    %v469 = vshrl.u32 %v468, 7
    %v470 = vsub.s32 0, %v469
    %v471 = vrot.slane %v466, %v470
    %473 = vmatprep.subr.mxu0 0.0
    %474 = vmatpush1.msra.mxu0 %v465
    %475 = vmatprep.subr.mxu0 0.0
    %476 = vmatpush1.msra.mxu0 %v464
    %477 = vmatprep.subr.mxu0 0.0
    %478 = vmatpush1.msra.mxu0 %v463
    %479 = vmatprep.subr.mxu0 0.0
    %480 = vmatpush1.msra.mxu0 %v462
    %481 = vmatprep.subr.mxu0 0.0
    %482 = vmatpush1.msra.mxu0 %v461
    %483 = vmatprep.subr.mxu0 0.0
    %484 = vmatpush1.msra.mxu0 %v460
    %485 = vmatprep.subr.mxu0 0.0
    %486 = vmatpush1.msra.mxu0 %v459
    %487 = vmatprep.subr.mxu0 0.0
    %488 = vmatpush1.msra.mxu0 %v458
    %489 = vmatprep.subr.mxu0 0.0
    %490 = vmatpush1.msra.mxu0 %v457
    %491 = vmatprep.subr.mxu0 0.0
    %492 = vmatpush1.msra.mxu0 %v456
    %493 = vmatprep.subr.mxu0 0.0
    %494 = vmatpush1.msra.mxu0 %v455
    %495 = vmatprep.subr.mxu0 0.0
    %496 = vmatpush1.msra.mxu0 %v454
    %497 = vmatprep.subr.mxu0 0.0
    %498 = vmatpush1.msra.mxu0 %v453
    %499 = vmatprep.subr.mxu0 0.0
    %500 = vmatpush1.msra.mxu0 %v452
    %501 = vmatprep.subr.mxu0 0.0
    %502 = vmatpush1.msra.mxu0 %v451
    %503 = vmatprep.subr.mxu0 0.0
    %504 = vmatpush1.msra.mxu0 %v450
    %505 = vmatprep.subr.mxu0 0.0
    %506 = vmatpush2.msra.mxu0 0.0
    %507 = vmatprep.subr.mxu0 0.0
    %508 = vmatpush2.msra.mxu0 0.0
    %509 = vmatprep.subr.mxu0 0.0
    %510 = vmatpush2.msra.mxu0 0.0
    %511 = vmatprep.subr.mxu0 0.0
    %512 = vmatpush2.msra.mxu0 0.0
    %513 = vmatprep.subr.mxu0 0.0
    %514 = vmatpush2.msra.mxu0 0.0
    %515 = vmatprep.subr.mxu0 0.0
    %516 = vmatpush2.msra.mxu0 0.0
    %517 = vmatprep.subr.mxu0 0.0
    %518 = vmatpush2.msra.mxu0 0.0
    %519 = vmatprep.subr.mxu0 0.0
    %520 = vmatpush2.msra.mxu0 0.0
    %521 = vmatprep.subr.mxu0 0.0
    %522 = vmatpush2.msra.mxu0 0.0
    %523 = vmatprep.subr.mxu0 0.0
    %524 = vmatpush2.msra.mxu0 0.0
    %525 = vmatprep.subr.mxu0 0.0
    %526 = vmatpush2.msra.mxu0 0.0
    %527 = vmatprep.subr.mxu0 0.0
    %528 = vmatpush2.msra.mxu0 0.0
    %529 = vmatprep.subr.mxu0 0.0
    %530 = vmatpush2.msra.mxu0 0.0
    %531 = vmatprep.subr.mxu0 0.0
    %532 = vmatpush2.msra.mxu0 0.0
    %533 = vmatprep.subr.mxu0 0.0
    %534 = vmatpush2.msra.mxu0 0.0
    %535 = vmatprep.subr.mxu0 0.0
    %536 = vmatpush2.msra.mxu0 0.0
    %537 = vmatprep.mubr.f32.mxu0 0.0
    %538 = vmatmul.mubr.f32.gmra.mxu0 %v449
    %v539 = vpop.f32.mrf.mxu0
    %v540 = vadd.f32 %v471, %v539
    %v541 = vpop.f32.mrf.mxu0
    %542 = vdwg.mxu0
    %v543 = vmul.f32 %v540, 0.5
    %v544 = vtanh.pop %v543
    %v545 = vmul.f32 %v544, 0.5
    %v546 = vadd.f32 %v545, 0.5
    %v547 = vld [vmem:[#allocation8] sm:$0xff]
    %v548 = vld [vmem:[#allocation8 + $0x8] sm:$0xff]
    %v549 = vld [vmem:[#allocation8 + $0x10] sm:$0xff]
    %v550 = vld [vmem:[#allocation8 + $0x18] sm:$0xff]
    %v551 = vld [vmem:[#allocation8 + $0x20] sm:$0xff]
    %v552 = vld [vmem:[#allocation8 + $0x28] sm:$0xff]
    %v553 = vld [vmem:[#allocation8 + $0x30] sm:$0xff]
    %v554 = vld [vmem:[#allocation8 + $0x38] sm:$0xff]
    %v555 = vld [vmem:[#allocation8 + $0x40] sm:$0xff]
    %v556 = vld [vmem:[#allocation8 + $0x48] sm:$0xff]
    %v557 = vld [vmem:[#allocation8 + $0x50] sm:$0xff]
    %v558 = vld [vmem:[#allocation8 + $0x58] sm:$0xff]
    %v559 = vld [vmem:[#allocation8 + $0x60] sm:$0xff]
    %v560 = vld [vmem:[#allocation8 + $0x68] sm:$0xff]
    %v561 = vld [vmem:[#allocation8 + $0x70] sm:$0xff]
    %v562 = vld [vmem:[#allocation8 + $0x78] sm:$0xff]
    %v563 = vld [vmem:[%s10] sm:$0x1]
    %v565 = vlaneseq
    %v566 = vshrl.u32 %v565, 7
    %v567 = vsub.s32 0, %v566
    %v568 = vrot.slane %v563, %v567
    %570 = vmatprep.subr.mxu0 0.0
    %571 = vmatpush1.msra.mxu0 %v562
    %572 = vmatprep.subr.mxu0 0.0
    %573 = vmatpush1.msra.mxu0 %v561
    %574 = vmatprep.subr.mxu0 0.0
    %575 = vmatpush1.msra.mxu0 %v560
    %576 = vmatprep.subr.mxu0 0.0
    %577 = vmatpush1.msra.mxu0 %v559
    %578 = vmatprep.subr.mxu0 0.0
    %579 = vmatpush1.msra.mxu0 %v558
    %580 = vmatprep.subr.mxu0 0.0
    %581 = vmatpush1.msra.mxu0 %v557
    %582 = vmatprep.subr.mxu0 0.0
    %583 = vmatpush1.msra.mxu0 %v556
    %584 = vmatprep.subr.mxu0 0.0
    %585 = vmatpush1.msra.mxu0 %v555
    %586 = vmatprep.subr.mxu0 0.0
    %587 = vmatpush1.msra.mxu0 %v554
    %588 = vmatprep.subr.mxu0 0.0
    %589 = vmatpush1.msra.mxu0 %v553
    %590 = vmatprep.subr.mxu0 0.0
    %591 = vmatpush1.msra.mxu0 %v552
    %592 = vmatprep.subr.mxu0 0.0
    %593 = vmatpush1.msra.mxu0 %v551
    %594 = vmatprep.subr.mxu0 0.0
    %595 = vmatpush1.msra.mxu0 %v550
    %596 = vmatprep.subr.mxu0 0.0
    %597 = vmatpush1.msra.mxu0 %v549
    %598 = vmatprep.subr.mxu0 0.0
    %599 = vmatpush1.msra.mxu0 %v548
    %600 = vmatprep.subr.mxu0 0.0
    %601 = vmatpush1.msra.mxu0 %v547
    %602 = vmatprep.subr.mxu0 0.0
    %603 = vmatpush2.msra.mxu0 0.0
    %604 = vmatprep.subr.mxu0 0.0
    %605 = vmatpush2.msra.mxu0 0.0
    %606 = vmatprep.subr.mxu0 0.0
    %607 = vmatpush2.msra.mxu0 0.0
    %608 = vmatprep.subr.mxu0 0.0
    %609 = vmatpush2.msra.mxu0 0.0
    %610 = vmatprep.subr.mxu0 0.0
    %611 = vmatpush2.msra.mxu0 0.0
    %612 = vmatprep.subr.mxu0 0.0
    %613 = vmatpush2.msra.mxu0 0.0
    %614 = vmatprep.subr.mxu0 0.0
    %615 = vmatpush2.msra.mxu0 0.0
    %616 = vmatprep.subr.mxu0 0.0
    %617 = vmatpush2.msra.mxu0 0.0
    %618 = vmatprep.subr.mxu0 0.0
    %619 = vmatpush2.msra.mxu0 0.0
    %620 = vmatprep.subr.mxu0 0.0
    %621 = vmatpush2.msra.mxu0 0.0
    %622 = vmatprep.subr.mxu0 0.0
    %623 = vmatpush2.msra.mxu0 0.0
    %624 = vmatprep.subr.mxu0 0.0
    %625 = vmatpush2.msra.mxu0 0.0
    %626 = vmatprep.subr.mxu0 0.0
    %627 = vmatpush2.msra.mxu0 0.0
    %628 = vmatprep.subr.mxu0 0.0
    %629 = vmatpush2.msra.mxu0 0.0
    %630 = vmatprep.subr.mxu0 0.0
    %631 = vmatpush2.msra.mxu0 0.0
    %632 = vmatprep.subr.mxu0 0.0
    %633 = vmatpush2.msra.mxu0 0.0
    %634 = vmatprep.mubr.f32.mxu0 0.0
    %635 = vmatmul.mubr.f32.gmra.mxu0 %v546
    %v636 = vpop.f32.mrf.mxu0
    %v637 = vadd.f32 %v568, %v636
    %v638 = vpop.f32.mrf.mxu0
    %639 = vdwg.mxu0
    %v640 = vmul.f32 %v637, 0.5
    %v641 = vtanh.pop %v640
    %v642 = vmul.f32 %v641, 0.5
    %v643 = vadd.f32 %v642, 0.5
    %v644 = vld [vmem:[#allocation10] sm:$0xff]
    %v645 = vld [vmem:[#allocation10 + $0x8] sm:$0xff]
    %v646 = vld [vmem:[#allocation10 + $0x10] sm:$0xff]
    %v647 = vld [vmem:[#allocation10 + $0x18] sm:$0xff]
    %v648 = vld [vmem:[#allocation10 + $0x20] sm:$0xff]
    %v649 = vld [vmem:[#allocation10 + $0x28] sm:$0xff]
    %v650 = vld [vmem:[#allocation10 + $0x30] sm:$0xff]
    %v651 = vld [vmem:[#allocation10 + $0x38] sm:$0xff]
    %v652 = vld [vmem:[#allocation10 + $0x40] sm:$0xff]
    %v653 = vld [vmem:[#allocation10 + $0x48] sm:$0xff]
    %v654 = vld [vmem:[#allocation10 + $0x50] sm:$0xff]
    %v655 = vld [vmem:[#allocation10 + $0x58] sm:$0xff]
    %v656 = vld [vmem:[#allocation10 + $0x60] sm:$0xff]
    %v657 = vld [vmem:[#allocation10 + $0x68] sm:$0xff]
    %v658 = vld [vmem:[#allocation10 + $0x70] sm:$0xff]
    %v659 = vld [vmem:[#allocation10 + $0x78] sm:$0xff]
    %v660 = vld [vmem:[%s12] sm:$0x1]
    %v662 = vlaneseq
    %v663 = vshrl.u32 %v662, 7
    %v664 = vsub.s32 0, %v663
    %v665 = vrot.slane %v660, %v664
    %667 = vmatprep.subr.mxu0 0.0
    %668 = vmatpush1.msra.mxu0 %v659
    %669 = vmatprep.subr.mxu0 0.0
    %670 = vmatpush1.msra.mxu0 %v658
    %671 = vmatprep.subr.mxu0 0.0
    %672 = vmatpush1.msra.mxu0 %v657
    %673 = vmatprep.subr.mxu0 0.0
    %674 = vmatpush1.msra.mxu0 %v656
    %675 = vmatprep.subr.mxu0 0.0
    %676 = vmatpush1.msra.mxu0 %v655
    %677 = vmatprep.subr.mxu0 0.0
    %678 = vmatpush1.msra.mxu0 %v654
    %679 = vmatprep.subr.mxu0 0.0
    %680 = vmatpush1.msra.mxu0 %v653
    %681 = vmatprep.subr.mxu0 0.0
    %682 = vmatpush1.msra.mxu0 %v652
    %683 = vmatprep.subr.mxu0 0.0
    %684 = vmatpush1.msra.mxu0 %v651
    %685 = vmatprep.subr.mxu0 0.0
    %686 = vmatpush1.msra.mxu0 %v650
    %687 = vmatprep.subr.mxu0 0.0
    %688 = vmatpush1.msra.mxu0 %v649
    %689 = vmatprep.subr.mxu0 0.0
    %690 = vmatpush1.msra.mxu0 %v648
    %691 = vmatprep.subr.mxu0 0.0
    %692 = vmatpush1.msra.mxu0 %v647
    %693 = vmatprep.subr.mxu0 0.0
    %694 = vmatpush1.msra.mxu0 %v646
    %695 = vmatprep.subr.mxu0 0.0
    %696 = vmatpush1.msra.mxu0 %v645
    %697 = vmatprep.subr.mxu0 0.0
    %698 = vmatpush1.msra.mxu0 %v644
    %699 = vmatprep.subr.mxu0 0.0
    %700 = vmatpush2.msra.mxu0 0.0
    %701 = vmatprep.subr.mxu0 0.0
    %702 = vmatpush2.msra.mxu0 0.0
    %703 = vmatprep.subr.mxu0 0.0
    %704 = vmatpush2.msra.mxu0 0.0
    %705 = vmatprep.subr.mxu0 0.0
    %706 = vmatpush2.msra.mxu0 0.0
    %707 = vmatprep.subr.mxu0 0.0
    %708 = vmatpush2.msra.mxu0 0.0
    %709 = vmatprep.subr.mxu0 0.0
    %710 = vmatpush2.msra.mxu0 0.0
    %711 = vmatprep.subr.mxu0 0.0
    %712 = vmatpush2.msra.mxu0 0.0
    %713 = vmatprep.subr.mxu0 0.0
    %714 = vmatpush2.msra.mxu0 0.0
    %715 = vmatprep.subr.mxu0 0.0
    %716 = vmatpush2.msra.mxu0 0.0
    %717 = vmatprep.subr.mxu0 0.0
    %718 = vmatpush2.msra.mxu0 0.0
    %719 = vmatprep.subr.mxu0 0.0
    %720 = vmatpush2.msra.mxu0 0.0
    %721 = vmatprep.subr.mxu0 0.0
    %722 = vmatpush2.msra.mxu0 0.0
    %723 = vmatprep.subr.mxu0 0.0
    %724 = vmatpush2.msra.mxu0 0.0
    %725 = vmatprep.subr.mxu0 0.0
    %726 = vmatpush2.msra.mxu0 0.0
    %727 = vmatprep.subr.mxu0 0.0
    %728 = vmatpush2.msra.mxu0 0.0
    %729 = vmatprep.subr.mxu0 0.0
    %730 = vmatpush2.msra.mxu0 0.0
    %731 = vmatprep.mubr.f32.mxu0 0.0
    %732 = vmatmul.mubr.f32.gmra.mxu0 %v643
    %v733 = vpop.f32.mrf.mxu0
    %v734 = vadd.f32 %v665, %v733
    %v735 = vpop.f32.mrf.mxu0
    %736 = vdwg.mxu0
    %v737 = vmul.f32 %v734, 0.5
    %v738 = vtanh.pop %v737
    %v739 = vmul.f32 %v738, 0.5
    %v740 = vadd.f32 %v739, 0.5
    %v741 = vld [vmem:[#allocation11] sm:$0xff]
    %v742 = vld [vmem:[#allocation11 + $0x8] sm:$0xff]
    %v743 = vld [vmem:[#allocation11 + $0x10] sm:$0xff]
    %v744 = vld [vmem:[#allocation11 + $0x18] sm:$0xff]
    %v745 = vld [vmem:[#allocation11 + $0x20] sm:$0xff]
    %v746 = vld [vmem:[#allocation11 + $0x28] sm:$0xff]
    %v747 = vld [vmem:[#allocation11 + $0x30] sm:$0xff]
    %v748 = vld [vmem:[#allocation11 + $0x38] sm:$0xff]
    %v749 = vld [vmem:[#allocation11 + $0x40] sm:$0xff]
    %v750 = vld [vmem:[#allocation11 + $0x48] sm:$0xff]
    %v751 = vld [vmem:[#allocation11 + $0x50] sm:$0xff]
    %v752 = vld [vmem:[#allocation11 + $0x58] sm:$0xff]
    %v753 = vld [vmem:[#allocation11 + $0x60] sm:$0xff]
    %v754 = vld [vmem:[#allocation11 + $0x68] sm:$0xff]
    %v755 = vld [vmem:[#allocation11 + $0x70] sm:$0xff]
    %v756 = vld [vmem:[#allocation11 + $0x78] sm:$0xff]
    %v757 = vld [vmem:[%s14] sm:$0x1]
    %v759 = vlaneseq
    %v760 = vshrl.u32 %v759, 7
    %v761 = vsub.s32 0, %v760
    %v762 = vrot.slane %v757, %v761
    %764 = vmatprep.subr.mxu0 0.0
    %765 = vmatpush1.msra.mxu0 %v756
    %766 = vmatprep.subr.mxu0 0.0
    %767 = vmatpush1.msra.mxu0 %v755
    %768 = vmatprep.subr.mxu0 0.0
    %769 = vmatpush1.msra.mxu0 %v754
    %770 = vmatprep.subr.mxu0 0.0
    %771 = vmatpush1.msra.mxu0 %v753
    %772 = vmatprep.subr.mxu0 0.0
    %773 = vmatpush1.msra.mxu0 %v752
    %774 = vmatprep.subr.mxu0 0.0
    %775 = vmatpush1.msra.mxu0 %v751
    %776 = vmatprep.subr.mxu0 0.0
    %777 = vmatpush1.msra.mxu0 %v750
    %778 = vmatprep.subr.mxu0 0.0
    %779 = vmatpush1.msra.mxu0 %v749
    %780 = vmatprep.subr.mxu0 0.0
    %781 = vmatpush1.msra.mxu0 %v748
    %782 = vmatprep.subr.mxu0 0.0
    %783 = vmatpush1.msra.mxu0 %v747
    %784 = vmatprep.subr.mxu0 0.0
    %785 = vmatpush1.msra.mxu0 %v746
    %786 = vmatprep.subr.mxu0 0.0
    %787 = vmatpush1.msra.mxu0 %v745
    %788 = vmatprep.subr.mxu0 0.0
    %789 = vmatpush1.msra.mxu0 %v744
    %790 = vmatprep.subr.mxu0 0.0
    %791 = vmatpush1.msra.mxu0 %v743
    %792 = vmatprep.subr.mxu0 0.0
    %793 = vmatpush1.msra.mxu0 %v742
    %794 = vmatprep.subr.mxu0 0.0
    %795 = vmatpush1.msra.mxu0 %v741
    %796 = vmatprep.subr.mxu0 0.0
    %797 = vmatpush2.msra.mxu0 0.0
    %798 = vmatprep.subr.mxu0 0.0
    %799 = vmatpush2.msra.mxu0 0.0
    %800 = vmatprep.subr.mxu0 0.0
    %801 = vmatpush2.msra.mxu0 0.0
    %802 = vmatprep.subr.mxu0 0.0
    %803 = vmatpush2.msra.mxu0 0.0
    %804 = vmatprep.subr.mxu0 0.0
    %805 = vmatpush2.msra.mxu0 0.0
    %806 = vmatprep.subr.mxu0 0.0
    %807 = vmatpush2.msra.mxu0 0.0
    %808 = vmatprep.subr.mxu0 0.0
    %809 = vmatpush2.msra.mxu0 0.0
    %810 = vmatprep.subr.mxu0 0.0
    %811 = vmatpush2.msra.mxu0 0.0
    %812 = vmatprep.subr.mxu0 0.0
    %813 = vmatpush2.msra.mxu0 0.0
    %814 = vmatprep.subr.mxu0 0.0
    %815 = vmatpush2.msra.mxu0 0.0
    %816 = vmatprep.subr.mxu0 0.0
    %817 = vmatpush2.msra.mxu0 0.0
    %818 = vmatprep.subr.mxu0 0.0
    %819 = vmatpush2.msra.mxu0 0.0
    %820 = vmatprep.subr.mxu0 0.0
    %821 = vmatpush2.msra.mxu0 0.0
    %822 = vmatprep.subr.mxu0 0.0
    %823 = vmatpush2.msra.mxu0 0.0
    %824 = vmatprep.subr.mxu0 0.0
    %825 = vmatpush2.msra.mxu0 0.0
    %826 = vmatprep.subr.mxu0 0.0
    %827 = vmatpush2.msra.mxu0 0.0
    %828 = vmatprep.mubr.f32.mxu0 0.0
    %829 = vmatmul.mubr.f32.gmra.mxu0 %v740
    %v830 = vpop.f32.mrf.mxu0
    %v831 = vadd.f32 %v762, %v830
    %v832 = vpop.f32.mrf.mxu0
    %833 = vdwg.mxu0
    %v834 = vmul.f32 %v831, 0.5
    %v835 = vtanh.pop %v834
    %v836 = vmul.f32 %v835, 0.5
    %v837 = vadd.f32 %v836, 0.5
    %v838 = vld [vmem:[#allocation13] sm:$0xff]
    %v839 = vld [vmem:[#allocation13 + $0x8] sm:$0xff]
    %v840 = vld [vmem:[#allocation13 + $0x10] sm:$0xff]
    %v841 = vld [vmem:[#allocation13 + $0x18] sm:$0xff]
    %v842 = vld [vmem:[#allocation13 + $0x20] sm:$0xff]
    %v843 = vld [vmem:[#allocation13 + $0x28] sm:$0xff]
    %v844 = vld [vmem:[#allocation13 + $0x30] sm:$0xff]
    %v845 = vld [vmem:[#allocation13 + $0x38] sm:$0xff]
    %v846 = vld [vmem:[#allocation13 + $0x40] sm:$0xff]
    %v847 = vld [vmem:[#allocation13 + $0x48] sm:$0xff]
    %v848 = vld [vmem:[#allocation13 + $0x50] sm:$0xff]
    %v849 = vld [vmem:[#allocation13 + $0x58] sm:$0xff]
    %v850 = vld [vmem:[#allocation13 + $0x60] sm:$0xff]
    %v851 = vld [vmem:[#allocation13 + $0x68] sm:$0xff]
    %v852 = vld [vmem:[#allocation13 + $0x70] sm:$0xff]
    %v853 = vld [vmem:[#allocation13 + $0x78] sm:$0xff]
    %v854 = vld [vmem:[%s16] sm:$0x1]
    %v856 = vlaneseq
    %v857 = vshrl.u32 %v856, 7
    %v858 = vsub.s32 0, %v857
    %v859 = vrot.slane %v854, %v858
    %861 = vmatprep.subr.mxu0 0.0
    %862 = vmatpush1.msra.mxu0 %v853
    %863 = vmatprep.subr.mxu0 0.0
    %864 = vmatpush1.msra.mxu0 %v852
    %865 = vmatprep.subr.mxu0 0.0
    %866 = vmatpush1.msra.mxu0 %v851
    %867 = vmatprep.subr.mxu0 0.0
    %868 = vmatpush1.msra.mxu0 %v850
    %869 = vmatprep.subr.mxu0 0.0
    %870 = vmatpush1.msra.mxu0 %v849
    %871 = vmatprep.subr.mxu0 0.0
    %872 = vmatpush1.msra.mxu0 %v848
    %873 = vmatprep.subr.mxu0 0.0
    %874 = vmatpush1.msra.mxu0 %v847
    %875 = vmatprep.subr.mxu0 0.0
    %876 = vmatpush1.msra.mxu0 %v846
    %877 = vmatprep.subr.mxu0 0.0
    %878 = vmatpush1.msra.mxu0 %v845
    %879 = vmatprep.subr.mxu0 0.0
    %880 = vmatpush1.msra.mxu0 %v844
    %881 = vmatprep.subr.mxu0 0.0
    %882 = vmatpush1.msra.mxu0 %v843
    %883 = vmatprep.subr.mxu0 0.0
    %884 = vmatpush1.msra.mxu0 %v842
    %885 = vmatprep.subr.mxu0 0.0
    %886 = vmatpush1.msra.mxu0 %v841
    %887 = vmatprep.subr.mxu0 0.0
    %888 = vmatpush1.msra.mxu0 %v840
    %889 = vmatprep.subr.mxu0 0.0
    %890 = vmatpush1.msra.mxu0 %v839
    %891 = vmatprep.subr.mxu0 0.0
    %892 = vmatpush1.msra.mxu0 %v838
    %893 = vmatprep.subr.mxu0 0.0
    %894 = vmatpush2.msra.mxu0 0.0
    %895 = vmatprep.subr.mxu0 0.0
    %896 = vmatpush2.msra.mxu0 0.0
    %897 = vmatprep.subr.mxu0 0.0
    %898 = vmatpush2.msra.mxu0 0.0
    %899 = vmatprep.subr.mxu0 0.0
    %900 = vmatpush2.msra.mxu0 0.0
    %901 = vmatprep.subr.mxu0 0.0
    %902 = vmatpush2.msra.mxu0 0.0
    %903 = vmatprep.subr.mxu0 0.0
    %904 = vmatpush2.msra.mxu0 0.0
    %905 = vmatprep.subr.mxu0 0.0
    %906 = vmatpush2.msra.mxu0 0.0
    %907 = vmatprep.subr.mxu0 0.0
    %908 = vmatpush2.msra.mxu0 0.0
    %909 = vmatprep.subr.mxu0 0.0
    %910 = vmatpush2.msra.mxu0 0.0
    %911 = vmatprep.subr.mxu0 0.0
    %912 = vmatpush2.msra.mxu0 0.0
    %913 = vmatprep.subr.mxu0 0.0
    %914 = vmatpush2.msra.mxu0 0.0
    %915 = vmatprep.subr.mxu0 0.0
    %916 = vmatpush2.msra.mxu0 0.0
    %917 = vmatprep.subr.mxu0 0.0
    %918 = vmatpush2.msra.mxu0 0.0
    %919 = vmatprep.subr.mxu0 0.0
    %920 = vmatpush2.msra.mxu0 0.0
    %921 = vmatprep.subr.mxu0 0.0
    %922 = vmatpush2.msra.mxu0 0.0
    %923 = vmatprep.subr.mxu0 0.0
    %924 = vmatpush2.msra.mxu0 0.0
    %925 = vmatprep.mubr.f32.mxu0 0.0
    %926 = vmatmul.mubr.f32.gmra.mxu0 %v837
    %v927 = vpop.f32.mrf.mxu0
    %v928 = vadd.f32 %v859, %v927
    %v929 = vpop.f32.mrf.mxu0
    %930 = vdwg.mxu0
    %v931 = vmul.f32 %v928, 0.5
    %v932 = vtanh.pop %v931
    %v933 = vmul.f32 %v932, 0.5
    %v934 = vadd.f32 %v933, 0.5
    %v935 = vld [vmem:[%s17] sm:$0xff]
    %v936 = vld [vmem:[%s17 + $0x8] sm:$0xff]
    %v937 = vld [vmem:[%s17 + $0x10] sm:$0xff]
    %v938 = vld [vmem:[%s17 + $0x18] sm:$0xff]
    %v939 = vld [vmem:[%s17 + $0x20] sm:$0xff]
    %v940 = vld [vmem:[%s17 + $0x28] sm:$0xff]
    %v941 = vld [vmem:[%s17 + $0x30] sm:$0xff]
    %v942 = vld [vmem:[%s17 + $0x38] sm:$0xff]
    %v943 = vld [vmem:[%s17 + $0x40] sm:$0xff]
    %v944 = vld [vmem:[%s17 + $0x48] sm:$0xff]
    %v945 = vld [vmem:[%s17 + $0x50] sm:$0xff]
    %v946 = vld [vmem:[%s17 + $0x58] sm:$0xff]
    %v947 = vld [vmem:[%s17 + $0x60] sm:$0xff]
    %v948 = vld [vmem:[%s17 + $0x68] sm:$0xff]
    %v949 = vld [vmem:[%s17 + $0x70] sm:$0xff]
    %v950 = vld [vmem:[%s17 + $0x78] sm:$0xff]
    %v951 = vld [vmem:[%s18] sm:$0x1]
    %v953 = vlaneseq
    %v954 = vshrl.u32 %v953, 7
    %v955 = vsub.s32 0, %v954
    %v956 = vrot.slane %v951, %v955
    %958 = vmatprep.subr.mxu0 0.0
    %959 = vmatpush1.msra.mxu0 %v950
    %960 = vmatprep.subr.mxu0 0.0
    %961 = vmatpush1.msra.mxu0 %v949
    %962 = vmatprep.subr.mxu0 0.0
    %963 = vmatpush1.msra.mxu0 %v948
    %964 = vmatprep.subr.mxu0 0.0
    %965 = vmatpush1.msra.mxu0 %v947
    %966 = vmatprep.subr.mxu0 0.0
    %967 = vmatpush1.msra.mxu0 %v946
    %968 = vmatprep.subr.mxu0 0.0
    %969 = vmatpush1.msra.mxu0 %v945
    %970 = vmatprep.subr.mxu0 0.0
    %971 = vmatpush1.msra.mxu0 %v944
    %972 = vmatprep.subr.mxu0 0.0
    %973 = vmatpush1.msra.mxu0 %v943
    %974 = vmatprep.subr.mxu0 0.0
    %975 = vmatpush1.msra.mxu0 %v942
    %976 = vmatprep.subr.mxu0 0.0
    %977 = vmatpush1.msra.mxu0 %v941
    %978 = vmatprep.subr.mxu0 0.0
    %979 = vmatpush1.msra.mxu0 %v940
    %980 = vmatprep.subr.mxu0 0.0
    %981 = vmatpush1.msra.mxu0 %v939
    %982 = vmatprep.subr.mxu0 0.0
    %983 = vmatpush1.msra.mxu0 %v938
    %984 = vmatprep.subr.mxu0 0.0
    %985 = vmatpush1.msra.mxu0 %v937
    %986 = vmatprep.subr.mxu0 0.0
    %987 = vmatpush1.msra.mxu0 %v936
    %988 = vmatprep.subr.mxu0 0.0
    %989 = vmatpush1.msra.mxu0 %v935
    %990 = vmatprep.subr.mxu0 0.0
    %991 = vmatpush2.msra.mxu0 0.0
    %992 = vmatprep.subr.mxu0 0.0
    %993 = vmatpush2.msra.mxu0 0.0
    %994 = vmatprep.subr.mxu0 0.0
    %995 = vmatpush2.msra.mxu0 0.0
    %996 = vmatprep.subr.mxu0 0.0
    %997 = vmatpush2.msra.mxu0 0.0
    %998 = vmatprep.subr.mxu0 0.0
    %999 = vmatpush2.msra.mxu0 0.0
    %1000 = vmatprep.subr.mxu0 0.0
    %1001 = vmatpush2.msra.mxu0 0.0
    %1002 = vmatprep.subr.mxu0 0.0
    %1003 = vmatpush2.msra.mxu0 0.0
    %1004 = vmatprep.subr.mxu0 0.0
    %1005 = vmatpush2.msra.mxu0 0.0
    %1006 = vmatprep.subr.mxu0 0.0
    %1007 = vmatpush2.msra.mxu0 0.0
    %1008 = vmatprep.subr.mxu0 0.0
    %1009 = vmatpush2.msra.mxu0 0.0
    %1010 = vmatprep.subr.mxu0 0.0
    %1011 = vmatpush2.msra.mxu0 0.0
    %1012 = vmatprep.subr.mxu0 0.0
    %1013 = vmatpush2.msra.mxu0 0.0
    %1014 = vmatprep.subr.mxu0 0.0
    %1015 = vmatpush2.msra.mxu0 0.0
    %1016 = vmatprep.subr.mxu0 0.0
    %1017 = vmatpush2.msra.mxu0 0.0
    %1018 = vmatprep.subr.mxu0 0.0
    %1019 = vmatpush2.msra.mxu0 0.0
    %1020 = vmatprep.subr.mxu0 0.0
    %1021 = vmatpush2.msra.mxu0 0.0
    %1022 = vmatprep.mubr.f32.mxu0 0.0
    %1023 = vmatmul.mubr.f32.gmra.mxu0 %v934
    %v1024 = vpop.f32.mrf.mxu0
    %v1025 = vadd.f32 %v956, %v1024
    %v1026 = vpop.f32.mrf.mxu0
    %1027 = vdwg.mxu0
    %vm1028 = vcmask 523264
    %1029 = vst.msk [vmem:[#allocation14] sm:$0xff] %vm1028, %v1025
    // Predicated region
    $region106: #{tpu_custom_call.1} parent=1 // pred_check
      _
    $region107: #{tpu_custom_call.1} parent=1 // pred_check_branch
      %1031 = sbr.rel (0) target = $region109
    $region108: #{tpu_custom_call.1} parent=1 // pred_region
      %s1033 = ssub.s32 128, 128
      %1034 = vsyncadd [#allocation4], %s1033
      %s1036 = sshll.u32 [#allocation14], 4
      %s1037 = int_to_ptr.vmem [resolvable:$true] %s1036
      %1039 = dma.vmem_to_hbm [thread:$0]  %s1037, 128, %s19, [#allocation4]
    $region109: #{tpu_custom_call.1} parent=1 // pred_fallthru
      _
    // Predicated region
    $region110: #{tpu_custom_call.1} parent=1 // pred_check
      _
    $region111: #{tpu_custom_call.1} parent=1 // pred_check_branch
      %1041 = sbr.rel (0) target = $region113
    $region112: #{tpu_custom_call.1} parent=1 // pred_region
      %1042 = dma.done [#allocation4], 128
    $region113: #{tpu_custom_call.1} parent=1 // pred_fallthru
      _
    %1043 = vsyncpa [#allocation3], 1
    %1044 = vsyncpa [#allocation6], 1
    %1045 = vsyncpa [#allocation9], 1
    %1046 = vsyncpa [#allocation12], 1
    %1047 = vsyncpa [#allocation4], 1

</llo_original>
